<compile_context>
chip_gen: v7x
topology: tpu7x:2x2x1
jax: 0.10.0
libtpu: 0.0.40
codegen_flags: <defaults>
</compile_context>

<pallas_src>
import functools
import math

import jax
import jax.numpy as jnp
from jax.experimental import pallas as pl
from jax.experimental.pallas import tpu as pltpu


def _layernorm(v, g, b, eps=1e-5):
    mu = jnp.mean(v, axis=-1, keepdims=True)
    var = jnp.mean((v - mu) ** 2, axis=-1, keepdims=True)
    return (v - mu) * jax.lax.rsqrt(var + eps) * g + b


def encoder_layer_kernel(
    xq_ref, xf_ref, mask_ref,
    ln1g_ref, ln1b_ref,
    wq_ref, bq_ref, wk_ref, bk_ref, wv_ref, bv_ref, wo_ref, bo_ref,
    ln2g_ref, ln2b_ref,
    w1_ref, b1_ref, w2_ref, b2_ref,
    o_ref,
    k_scr, v_scr, q_scr,
    *, num_heads: int, ff_chunk: int,
):
    TQ, D = q_scr.shape
    S = k_scr.shape[0]
    hd = D // num_heads
    scale = jnp.float32(1.0 / math.sqrt(hd))

    ln1_g = ln1g_ref[0]
    ln1_b = ln1b_ref[0]

    # ---- once per batch element: K / V projection over the full sequence ----
    # Full-width matmuls (N = D) keep the MXU busy; results stored bf16 in VMEM
    # scratch and reused by every query tile of this batch element.
    @pl.when(pl.program_id(1) == 0)
    def _():
        xn_f = _layernorm(xf_ref[0], ln1_g, ln1_b).astype(jnp.bfloat16)
        k = jnp.dot(xn_f, wk_ref[...], preferred_element_type=jnp.float32) + bk_ref[0]
        v = jnp.dot(xn_f, wv_ref[...], preferred_element_type=jnp.float32) + bv_ref[0]
        k_scr[...] = k.astype(jnp.bfloat16)
        v_scr[...] = v.astype(jnp.bfloat16)

    xq = xq_ref[0]                       # (TQ, D) f32 residual stream
    keep = mask_ref[0] > 0.0             # (1, S) bool, broadcasts over query rows

    # ---- residual block 1: x + SelfAttention(LayerNorm(x)) ----
    xn_q = _layernorm(xq, ln1_g, ln1_b).astype(jnp.bfloat16)
    q = jnp.dot(xn_q, wq_ref[...], preferred_element_type=jnp.float32) + bq_ref[0]
    q_scr[...] = (q * scale).astype(jnp.bfloat16)   # fold 1/sqrt(hd) into Q

    neg_inf = jnp.float32(-1e10)
    x1 = xq + bo_ref[0]                  # fold the out-projection bias into the residual
    for h in range(num_heads):           # static unroll; head slices are VMEM-ref loads
        sl = slice(h * hd, (h + 1) * hd)
        qh = q_scr[:, sl]                # (TQ, hd) bf16
        kh = k_scr[:, sl]                # (S,  hd) bf16
        vh = v_scr[:, sl]                # (S,  hd) bf16
        # scores: contract head_dim directly (no explicit transpose of K)
        energy = jax.lax.dot_general(
            qh, kh, dimension_numbers=(((1,), (1,)), ((), ())),
            preferred_element_type=jnp.float32)                     # (TQ, S)
        energy = jnp.where(keep, energy, neg_inf)
        # explicit softmax; divide via EUP reciprocal
        e_max = jnp.max(energy, axis=-1, keepdims=True)
        p = jnp.exp(energy - e_max)
        denom = jnp.sum(p, axis=-1, keepdims=True)
        attn = (p * pl.reciprocal(denom, approx=True)).astype(jnp.bfloat16)
        ctx_h = jnp.dot(attn, vh, preferred_element_type=jnp.float32)   # (TQ, hd)
        # per-head rows of the output projection; accumulate into the residual
        x1 = x1 + jnp.dot(ctx_h.astype(jnp.bfloat16), wo_ref[sl, :],
                          preferred_element_type=jnp.float32)

    # ---- residual block 2: x1 + FFN(LayerNorm(x1)), d_ff chunked ----
    xn2 = _layernorm(x1, ln2g_ref[0], ln2b_ref[0]).astype(jnp.bfloat16)
    ff = jnp.zeros((TQ, D), jnp.float32) + b2_ref[0]
    d_ff = w1_ref.shape[1]
    for c in range(0, d_ff, ff_chunk):
        csl = slice(c, c + ff_chunk)
        h1 = jnp.dot(xn2, w1_ref[:, csl], preferred_element_type=jnp.float32) + b1_ref[0, csl]
        h1 = jnp.maximum(h1, 0.0).astype(jnp.bfloat16)
        ff = ff + jnp.dot(h1, w2_ref[csl, :], preferred_element_type=jnp.float32)

    o_ref[0] = (x1 + ff).astype(o_ref.dtype)


def pure_encoder_layer(x, src_mask, params, num_heads, *, q_tile=None, ff_chunk=None):
    B, S, D = x.shape
    d_ff = params["w1"].shape[1]
    assert D % num_heads == 0

    if q_tile is None:
        q_tile = min(S, 128)
    assert S % q_tile == 0, "q_tile must divide seq_len"
    n_q = S // q_tile

    if ff_chunk is None:
        ff_chunk = min(d_ff, 2048)
    assert d_ff % ff_chunk == 0, "ff_chunk must divide d_ff"

    bf16 = jnp.bfloat16
    wq = params["wq"].astype(bf16)
    wk = params["wk"].astype(bf16)
    wv = params["wv"].astype(bf16)
    wo = params["wo"].astype(bf16)
    w1 = params["w1"].astype(bf16)
    w2 = params["w2"].astype(bf16)

    def rep(shape):  # weights / params: same block for every grid point
        return pl.BlockSpec(shape, lambda b, qi: (0, 0))

    in_specs = [
        pl.BlockSpec((1, q_tile, D), lambda b, qi: (b, qi, 0)),   # x: query tile
        pl.BlockSpec((1, S, D), lambda b, qi: (b, 0, 0)),         # x: full seq (K/V source)
        pl.BlockSpec((1, 1, S), lambda b, qi: (b, 0, 0)),         # src_mask
        rep((1, D)), rep((1, D)),                                 # ln1 gamma/beta
        rep((D, D)), rep((1, D)),                                 # Wq, bq
        rep((D, D)), rep((1, D)),                                 # Wk, bk
        rep((D, D)), rep((1, D)),                                 # Wv, bv
        rep((D, D)), rep((1, D)),                                 # Wo, bo
        rep((1, D)), rep((1, D)),                                 # ln2 gamma/beta
        rep((D, d_ff)), rep((1, d_ff)),                           # W1, b1
        rep((d_ff, D)), rep((1, D)),                              # W2, b2
    ]

    kernel = functools.partial(encoder_layer_kernel,
                               num_heads=num_heads, ff_chunk=ff_chunk)
    return pl.pallas_call(
        kernel,
        out_shape=jax.ShapeDtypeStruct((B, S, D), x.dtype),
        grid_spec=pltpu.PrefetchScalarGridSpec(
            num_scalar_prefetch=0,
            grid=(B, n_q),
            in_specs=in_specs,
            out_specs=pl.BlockSpec((1, q_tile, D), lambda b, qi: (b, qi, 0)),
            scratch_shapes=[
                pltpu.VMEM((S, D), bf16),        # K (all heads, full sequence)
                pltpu.VMEM((S, D), bf16),        # V
                pltpu.VMEM((q_tile, D), bf16),   # scaled Q for the current tile
            ],
        ),
        compiler_params=pltpu.CompilerParams(
            # batch axis parallel (megacore); query-tile axis arbitrary so the
            # K/V scratch legally carries across query tiles of the same batch row.
            dimension_semantics=("parallel", "arbitrary"),
            vmem_limit_bytes=64 * 1024 * 1024,
        ),
    )(
        x, x, src_mask,
        params["ln1_g"], params["ln1_b"],
        wq, params["bq"], wk, params["bk"], wv, params["bv"], wo, params["bo"],
        params["ln2_g"], params["ln2_b"],
        w1, params["b1"], w2, params["b2"],
    )


def reference_encoder_layer(x, src_mask, params, num_heads):
    """Pure-JAX f32 reference mirroring the PyTorch forward (eval mode)."""
    B, S, D = x.shape
    hd = D // num_heads

    def ln(v, g, b):
        mu = jnp.mean(v, -1, keepdims=True)
        var = jnp.mean((v - mu) ** 2, -1, keepdims=True)
        return (v - mu) / jnp.sqrt(var + 1e-5) * g + b

    xn = ln(x, params["ln1_g"][0], params["ln1_b"][0])
    q = xn @ params["wq"] + params["bq"][0]
    k = xn @ params["wk"] + params["bk"][0]
    v = xn @ params["wv"] + params["bv"][0]
    q = q.reshape(B, S, num_heads, hd).transpose(0, 2, 1, 3)
    k = k.reshape(B, S, num_heads, hd).transpose(0, 2, 1, 3)
    v = v.reshape(B, S, num_heads, hd).transpose(0, 2, 1, 3)
    energy = jnp.einsum("bhqd,bhkd->bhqk", q, k) / jnp.sqrt(jnp.float32(hd))
    m = src_mask[:, None, :, :]  # (B,1,1,S)
    energy = jnp.where(m > 0, energy, -1e10)
    attn = jax.nn.softmax(energy, -1)
    ctx = jnp.einsum("bhqk,bhkd->bhqd", attn, v).transpose(0, 2, 1, 3).reshape(B, S, D)
    x1 = x + (ctx @ params["wo"] + params["bo"][0])
    xn2 = ln(x1, params["ln2_g"][0], params["ln2_b"][0])
    h1 = jnp.maximum(xn2 @ params["w1"] + params["b1"][0], 0.0)
    return x1 + (h1 @ params["w2"] + params["b2"][0])


def init_params(key, d_model, d_ff):
    ks = jax.random.split(key, 12)
    s = 0.02
    return {
        "ln1_g": jnp.ones((1, d_model), jnp.float32),
        "ln1_b": jnp.zeros((1, d_model), jnp.float32),
        "ln2_g": jnp.ones((1, d_model), jnp.float32),
        "ln2_b": jnp.zeros((1, d_model), jnp.float32),
        "wq": s * jax.random.normal(ks[0], (d_model, d_model), jnp.float32),
        "bq": s * jax.random.normal(ks[1], (1, d_model), jnp.float32),
        "wk": s * jax.random.normal(ks[2], (d_model, d_model), jnp.float32),
        "bk": s * jax.random.normal(ks[3], (1, d_model), jnp.float32),
        "wv": s * jax.random.normal(ks[4], (d_model, d_model), jnp.float32),
        "bv": s * jax.random.normal(ks[5], (1, d_model), jnp.float32),
        "wo": s * jax.random.normal(ks[6], (d_model, d_model), jnp.float32),
        "bo": s * jax.random.normal(ks[7], (1, d_model), jnp.float32),
        "w1": s * jax.random.normal(ks[8], (d_model, d_ff), jnp.float32),
        "b1": s * jax.random.normal(ks[9], (1, d_ff), jnp.float32),
        "w2": s * jax.random.normal(ks[10], (d_ff, d_model), jnp.float32),
        "b2": s * jax.random.normal(ks[11], (1, d_model), jnp.float32),
    }


if __name__ == "__main__":
    B, S, D, H, d_ff = 2, 16, 32, 4, 64

    key = jax.random.PRNGKey(0)
    kx, kp = jax.random.split(key)
    x = jax.random.normal(kx, (B, S, D), jnp.float32)

    # src_mask: (B, 1, S), 1 = keep, 0 = pad (second batch row has 3 padded tokens)
    src_mask = jnp.ones((B, 1, S), jnp.float32)
    src_mask = src_mask.at[1, 0, S - 3:].set(0.0)

    params = init_params(kp, D, d_ff)

    out = pure_encoder_layer(x, src_mask, params, num_heads=H, q_tile=8)
    out = jax.block_until_ready(out)

    ref = reference_encoder_layer(x, src_mask, params, num_heads=H)
    assert out.shape == (B, S, D)
    max_err = float(jnp.max(jnp.abs(out - ref)))
    # bf16 MXU operands + approx reciprocal -> looser tolerance than pure f32.
    assert jnp.allclose(out, ref, atol=2e-2, rtol=2e-2), f"mismatch vs reference (max abs err {max_err})"

    print("KERNEL_OK")
</pallas_src>

<mosaic_0001>
module attributes {stable_mosaic.version = 11 : i64} {
  func.func @encoder_layer_kernel(%arg0: i32, %arg1: i32, %arg2: memref<1x8x32xf32, #tpu.memory_space<vmem>>, %arg3: memref<1x16x32xf32, #tpu.memory_space<vmem>>, %arg4: memref<1x1x16xf32, #tpu.memory_space<vmem>>, %arg5: memref<1x32xf32, #tpu.memory_space<vmem>>, %arg6: memref<1x32xf32, #tpu.memory_space<vmem>>, %arg7: memref<32x32xbf16, #tpu.memory_space<vmem>>, %arg8: memref<1x32xf32, #tpu.memory_space<vmem>>, %arg9: memref<32x32xbf16, #tpu.memory_space<vmem>>, %arg10: memref<1x32xf32, #tpu.memory_space<vmem>>, %arg11: memref<32x32xbf16, #tpu.memory_space<vmem>>, %arg12: memref<1x32xf32, #tpu.memory_space<vmem>>, %arg13: memref<32x32xbf16, #tpu.memory_space<vmem>>, %arg14: memref<1x32xf32, #tpu.memory_space<vmem>>, %arg15: memref<1x32xf32, #tpu.memory_space<vmem>>, %arg16: memref<1x32xf32, #tpu.memory_space<vmem>>, %arg17: memref<32x64xbf16, #tpu.memory_space<vmem>>, %arg18: memref<1x64xf32, #tpu.memory_space<vmem>>, %arg19: memref<64x32xbf16, #tpu.memory_space<vmem>>, %arg20: memref<1x32xf32, #tpu.memory_space<vmem>>, %arg21: memref<1x8x32xf32, #tpu.memory_space<vmem>>, %arg22: memref<16x32xbf16, #tpu.memory_space<vmem>>, %arg23: memref<16x32xbf16, #tpu.memory_space<vmem>>, %arg24: memref<8x32xbf16, #tpu.memory_space<vmem>>) attributes {dimension_semantics = [#tpu.dimension_semantics<parallel>, #tpu.dimension_semantics<arbitrary>], iteration_bounds = array<i64: 2, 2>, scalar_prefetch = 0 : i64, scratch_operands = 3 : i64, tpu.core_type = #tpu.core_type<tc>, window_params = [{transform_indices = @transform_0, window_bounds = array<i64: 1, 8, 32>}, {transform_indices = @transform_1, window_bounds = array<i64: 1, 16, 32>}, {transform_indices = @transform_2, window_bounds = array<i64: 1, 1, 16>}, {pipeline_mode = #tpu.pipeline_mode<synchronous>, transform_indices = @transform_3, window_bounds = array<i64: 1, 32>}, {pipeline_mode = #tpu.pipeline_mode<synchronous>, transform_indices = @transform_4, window_bounds = array<i64: 1, 32>}, {pipeline_mode = #tpu.pipeline_mode<synchronous>, transform_indices = @transform_5, window_bounds = array<i64: 32, 32>}, {pipeline_mode = #tpu.pipeline_mode<synchronous>, transform_indices = @transform_6, window_bounds = array<i64: 1, 32>}, {pipeline_mode = #tpu.pipeline_mode<synchronous>, transform_indices = @transform_7, window_bounds = array<i64: 32, 32>}, {pipeline_mode = #tpu.pipeline_mode<synchronous>, transform_indices = @transform_8, window_bounds = array<i64: 1, 32>}, {pipeline_mode = #tpu.pipeline_mode<synchronous>, transform_indices = @transform_9, window_bounds = array<i64: 32, 32>}, {pipeline_mode = #tpu.pipeline_mode<synchronous>, transform_indices = @transform_10, window_bounds = array<i64: 1, 32>}, {pipeline_mode = #tpu.pipeline_mode<synchronous>, transform_indices = @transform_11, window_bounds = array<i64: 32, 32>}, {pipeline_mode = #tpu.pipeline_mode<synchronous>, transform_indices = @transform_12, window_bounds = array<i64: 1, 32>}, {pipeline_mode = #tpu.pipeline_mode<synchronous>, transform_indices = @transform_13, window_bounds = array<i64: 1, 32>}, {pipeline_mode = #tpu.pipeline_mode<synchronous>, transform_indices = @transform_14, window_bounds = array<i64: 1, 32>}, {pipeline_mode = #tpu.pipeline_mode<synchronous>, transform_indices = @transform_15, window_bounds = array<i64: 32, 64>}, {pipeline_mode = #tpu.pipeline_mode<synchronous>, transform_indices = @transform_16, window_bounds = array<i64: 1, 64>}, {pipeline_mode = #tpu.pipeline_mode<synchronous>, transform_indices = @transform_17, window_bounds = array<i64: 64, 32>}, {pipeline_mode = #tpu.pipeline_mode<synchronous>, transform_indices = @transform_18, window_bounds = array<i64: 1, 32>}, {transform_indices = @transform_19, window_bounds = array<i64: 1, 8, 32>}]} {
    %c0 = arith.constant 0 : index
    %c0_0 = arith.constant 0 : index
    %0 = vector.load %arg5[%c0, %c0_0] : memref<1x32xf32, #tpu.memory_space<vmem>>, vector<1x32xf32>
    %1 = vector.shape_cast %0 : vector<1x32xf32> to vector<32xf32>
    %c0_1 = arith.constant 0 : index
    %c0_2 = arith.constant 0 : index
    %2 = vector.load %arg6[%c0_1, %c0_2] : memref<1x32xf32, #tpu.memory_space<vmem>>, vector<1x32xf32>
    %3 = vector.shape_cast %2 : vector<1x32xf32> to vector<32xf32>
    %c0_i32 = arith.constant 0 : i32
    %4 = arith.cmpi eq, %arg1, %c0_i32 : i32
    %5 = arith.extui %4 : i1 to i32
    %c0_i32_3 = arith.constant 0 : i32
    %6 = arith.cmpi ne, %5, %c0_i32_3 : i32
    scf.if %6 {
      %c0_102 = arith.constant 0 : index
      %c0_103 = arith.constant 0 : index
      %c0_104 = arith.constant 0 : index
      %202 = vector.load %arg3[%c0_102, %c0_103, %c0_104] : memref<1x16x32xf32, #tpu.memory_space<vmem>>, vector<1x16x32xf32>
      %203 = vector.shape_cast %202 : vector<1x16x32xf32> to vector<16x32xf32>
      %cst_105 = arith.constant dense<0.000000e+00> : vector<16xf32>
      %204 = vector.multi_reduction <add>, %203, %cst_105 [1] : vector<16x32xf32> to vector<16xf32>
      %205 = vector.shape_cast %204 : vector<16xf32> to vector<16x1xf32>
      %cst_106 = arith.constant 3.200000e+01 : f32
      %206 = vector.broadcast %cst_106 : f32 to vector<16x1xf32>
      %207 = arith.divf %205, %206 : vector<16x1xf32>
      %208 = vector.broadcast %207 : vector<16x1xf32> to vector<16x32xf32>
      %209 = arith.subf %203, %208 : vector<16x32xf32>
      %210 = arith.mulf %209, %209 : vector<16x32xf32>
      %cst_107 = arith.constant dense<0.000000e+00> : vector<16xf32>
      %211 = vector.multi_reduction <add>, %210, %cst_107 [1] : vector<16x32xf32> to vector<16xf32>
      %212 = vector.shape_cast %211 : vector<16xf32> to vector<16x1xf32>
      %cst_108 = arith.constant 3.200000e+01 : f32
      %213 = vector.broadcast %cst_108 : f32 to vector<16x1xf32>
      %214 = arith.divf %212, %213 : vector<16x1xf32>
      %215 = vector.broadcast %207 : vector<16x1xf32> to vector<16x32xf32>
      %216 = arith.subf %203, %215 : vector<16x32xf32>
      %cst_109 = arith.constant 9.99999974E-6 : f32
      %217 = vector.broadcast %cst_109 : f32 to vector<16x1xf32>
      %218 = arith.addf %214, %217 : vector<16x1xf32>
      %219 = math.rsqrt %218 : vector<16x1xf32>
      %220 = vector.broadcast %219 : vector<16x1xf32> to vector<16x32xf32>
      %221 = arith.mulf %216, %220 : vector<16x32xf32>
      %222 = vector.shape_cast %1 : vector<32xf32> to vector<1x32xf32>
      %223 = vector.broadcast %222 : vector<1x32xf32> to vector<16x32xf32>
      %224 = arith.mulf %221, %223 : vector<16x32xf32>
      %225 = vector.shape_cast %3 : vector<32xf32> to vector<1x32xf32>
      %226 = vector.broadcast %225 : vector<1x32xf32> to vector<16x32xf32>
      %227 = arith.addf %224, %226 : vector<16x32xf32>
      %228 = arith.truncf %227 : vector<16x32xf32> to vector<16x32xbf16>
      %c0_110 = arith.constant 0 : index
      %c0_111 = arith.constant 0 : index
      %229 = vector.load %arg9[%c0_110, %c0_111] : memref<32x32xbf16, #tpu.memory_space<vmem>>, vector<32x32xbf16>
      %cst_112 = arith.constant dense<0.000000e+00> : vector<16x32xf32>
      %230 = tpu.matmul %228, %229, %cst_112 {dimension_numbers = #tpu.dot_dimension_numbers<[1], [0], [0], [1], [0, 0, 1, 1], [], []>} : vector<16x32xbf16>, vector<32x32xbf16>, vector<16x32xf32> -> vector<16x32xf32>
      %c0_113 = arith.constant 0 : index
      %c0_114 = arith.constant 0 : index
      %231 = vector.load %arg10[%c0_113, %c0_114] : memref<1x32xf32, #tpu.memory_space<vmem>>, vector<1x32xf32>
      %232 = vector.shape_cast %231 : vector<1x32xf32> to vector<32xf32>
      %233 = vector.shape_cast %232 : vector<32xf32> to vector<1x32xf32>
      %234 = vector.broadcast %233 : vector<1x32xf32> to vector<16x32xf32>
      %235 = arith.addf %230, %234 : vector<16x32xf32>
      %c0_115 = arith.constant 0 : index
      %c0_116 = arith.constant 0 : index
      %236 = vector.load %arg11[%c0_115, %c0_116] : memref<32x32xbf16, #tpu.memory_space<vmem>>, vector<32x32xbf16>
      %cst_117 = arith.constant dense<0.000000e+00> : vector<16x32xf32>
      %237 = tpu.matmul %228, %236, %cst_117 {dimension_numbers = #tpu.dot_dimension_numbers<[1], [0], [0], [1], [0, 0, 1, 1], [], []>} : vector<16x32xbf16>, vector<32x32xbf16>, vector<16x32xf32> -> vector<16x32xf32>
      %c0_118 = arith.constant 0 : index
      %c0_119 = arith.constant 0 : index
      %238 = vector.load %arg12[%c0_118, %c0_119] : memref<1x32xf32, #tpu.memory_space<vmem>>, vector<1x32xf32>
      %239 = vector.shape_cast %238 : vector<1x32xf32> to vector<32xf32>
      %240 = vector.shape_cast %239 : vector<32xf32> to vector<1x32xf32>
      %241 = vector.broadcast %240 : vector<1x32xf32> to vector<16x32xf32>
      %242 = arith.addf %237, %241 : vector<16x32xf32>
      %243 = arith.truncf %235 : vector<16x32xf32> to vector<16x32xbf16>
      %c0_120 = arith.constant 0 : index
      %c0_121 = arith.constant 0 : index
      %244 = vector.load %arg22[%c0_120, %c0_121] : memref<16x32xbf16, #tpu.memory_space<vmem>>, vector<16x32xbf16>
      tpu.vector_store %arg22[%c0_120, %c0_121], %243 {strides = array<i32>} : memref<16x32xbf16, #tpu.memory_space<vmem>>, vector<16x32xbf16>,
      %245 = arith.truncf %242 : vector<16x32xf32> to vector<16x32xbf16>
      %c0_122 = arith.constant 0 : index
      %c0_123 = arith.constant 0 : index
      %246 = vector.load %arg23[%c0_122, %c0_123] : memref<16x32xbf16, #tpu.memory_space<vmem>>, vector<16x32xbf16>
      tpu.vector_store %arg23[%c0_122, %c0_123], %245 {strides = array<i32>} : memref<16x32xbf16, #tpu.memory_space<vmem>>, vector<16x32xbf16>,
    } else {
    }
    %c0_4 = arith.constant 0 : index
    %c0_5 = arith.constant 0 : index
    %c0_6 = arith.constant 0 : index
    %7 = vector.load %arg2[%c0_4, %c0_5, %c0_6] : memref<1x8x32xf32, #tpu.memory_space<vmem>>, vector<1x8x32xf32>
    %8 = vector.shape_cast %7 : vector<1x8x32xf32> to vector<8x32xf32>
    %c0_7 = arith.constant 0 : index
    %c0_8 = arith.constant 0 : index
    %c0_9 = arith.constant 0 : index
    %9 = vector.load %arg4[%c0_7, %c0_8, %c0_9] : memref<1x1x16xf32, #tpu.memory_space<vmem>>, vector<1x1x16xf32>
    %10 = vector.shape_cast %9 : vector<1x1x16xf32> to vector<1x16xf32>
    %cst = arith.constant 0.000000e+00 : f32
    %11 = vector.broadcast %cst : f32 to vector<1x16xf32>
    %12 = arith.cmpf ogt, %10, %11 : vector<1x16xf32>
    %cst_10 = arith.constant dense<0.000000e+00> : vector<8xf32>
    %13 = vector.multi_reduction <add>, %8, %cst_10 [1] : vector<8x32xf32> to vector<8xf32>
    %14 = vector.shape_cast %13 : vector<8xf32> to vector<8x1xf32>
    %cst_11 = arith.constant 3.200000e+01 : f32
    %15 = vector.broadcast %cst_11 : f32 to vector<8x1xf32>
    %16 = arith.divf %14, %15 : vector<8x1xf32>
    %17 = vector.broadcast %16 : vector<8x1xf32> to vector<8x32xf32>
    %18 = arith.subf %8, %17 : vector<8x32xf32>
    %19 = arith.mulf %18, %18 : vector<8x32xf32>
    %cst_12 = arith.constant dense<0.000000e+00> : vector<8xf32>
    %20 = vector.multi_reduction <add>, %19, %cst_12 [1] : vector<8x32xf32> to vector<8xf32>
    %21 = vector.shape_cast %20 : vector<8xf32> to vector<8x1xf32>
    %cst_13 = arith.constant 3.200000e+01 : f32
    %22 = vector.broadcast %cst_13 : f32 to vector<8x1xf32>
    %23 = arith.divf %21, %22 : vector<8x1xf32>
    %24 = vector.broadcast %16 : vector<8x1xf32> to vector<8x32xf32>
    %25 = arith.subf %8, %24 : vector<8x32xf32>
    %cst_14 = arith.constant 9.99999974E-6 : f32
    %26 = vector.broadcast %cst_14 : f32 to vector<8x1xf32>
    %27 = arith.addf %23, %26 : vector<8x1xf32>
    %28 = math.rsqrt %27 : vector<8x1xf32>
    %29 = vector.broadcast %28 : vector<8x1xf32> to vector<8x32xf32>
    %30 = arith.mulf %25, %29 : vector<8x32xf32>
    %31 = vector.shape_cast %1 : vector<32xf32> to vector<1x32xf32>
    %32 = vector.broadcast %31 : vector<1x32xf32> to vector<8x32xf32>
    %33 = arith.mulf %30, %32 : vector<8x32xf32>
    %34 = vector.shape_cast %3 : vector<32xf32> to vector<1x32xf32>
    %35 = vector.broadcast %34 : vector<1x32xf32> to vector<8x32xf32>
    %36 = arith.addf %33, %35 : vector<8x32xf32>
    %37 = arith.truncf %36 : vector<8x32xf32> to vector<8x32xbf16>
    %c0_15 = arith.constant 0 : index
    %c0_16 = arith.constant 0 : index
    %38 = vector.load %arg7[%c0_15, %c0_16] : memref<32x32xbf16, #tpu.memory_space<vmem>>, vector<32x32xbf16>
    %cst_17 = arith.constant dense<0.000000e+00> : vector<8x32xf32>
    %39 = tpu.matmul %37, %38, %cst_17 {dimension_numbers = #tpu.dot_dimension_numbers<[1], [0], [0], [1], [0, 0, 1, 1], [], []>} : vector<8x32xbf16>, vector<32x32xbf16>, vector<8x32xf32> -> vector<8x32xf32>
    %c0_18 = arith.constant 0 : index
    %c0_19 = arith.constant 0 : index
    %40 = vector.load %arg8[%c0_18, %c0_19] : memref<1x32xf32, #tpu.memory_space<vmem>>, vector<1x32xf32>
    %41 = vector.shape_cast %40 : vector<1x32xf32> to vector<32xf32>
    %42 = vector.shape_cast %41 : vector<32xf32> to vector<1x32xf32>
    %43 = vector.broadcast %42 : vector<1x32xf32> to vector<8x32xf32>
    %44 = arith.addf %39, %43 : vector<8x32xf32>
    %cst_20 = arith.constant 0.353553385 : f32
    %45 = vector.broadcast %cst_20 : f32 to vector<8x32xf32>
    %46 = arith.mulf %44, %45 : vector<8x32xf32>
    %47 = arith.truncf %46 : vector<8x32xf32> to vector<8x32xbf16>
    %c0_21 = arith.constant 0 : index
    %c0_22 = arith.constant 0 : index
    %48 = vector.load %arg24[%c0_21, %c0_22] : memref<8x32xbf16, #tpu.memory_space<vmem>>, vector<8x32xbf16>
    tpu.vector_store %arg24[%c0_21, %c0_22], %47 {strides = array<i32>} : memref<8x32xbf16, #tpu.memory_space<vmem>>, vector<8x32xbf16>,
    %c0_23 = arith.constant 0 : index
    %c0_24 = arith.constant 0 : index
    %49 = vector.load %arg14[%c0_23, %c0_24] : memref<1x32xf32, #tpu.memory_space<vmem>>, vector<1x32xf32>
    %50 = vector.shape_cast %49 : vector<1x32xf32> to vector<32xf32>
    %51 = vector.shape_cast %50 : vector<32xf32> to vector<1x32xf32>
    %52 = vector.broadcast %51 : vector<1x32xf32> to vector<8x32xf32>
    %53 = arith.addf %8, %52 : vector<8x32xf32>
    %c0_25 = arith.constant 0 : index
    %c0_26 = arith.constant 0 : index
    %54 = vector.load %arg24[%c0_25, %c0_26] : memref<8x32xbf16, #tpu.memory_space<vmem>>, vector<8x8xbf16>
    %c0_27 = arith.constant 0 : index
    %c0_28 = arith.constant 0 : index
    %55 = vector.load %arg22[%c0_27, %c0_28] : memref<16x32xbf16, #tpu.memory_space<vmem>>, vector<16x8xbf16>
    %c0_29 = arith.constant 0 : index
    %c0_30 = arith.constant 0 : index
    %56 = vector.load %arg23[%c0_29, %c0_30] : memref<16x32xbf16, #tpu.memory_space<vmem>>, vector<16x8xbf16>
    %cst_31 = arith.constant dense<0.000000e+00> : vector<8x16xf32>
    %57 = tpu.matmul %54, %55, %cst_31 {dimension_numbers = #tpu.dot_dimension_numbers<[1], [1], [0], [0], [0, 0, 1, 0], [], []>} : vector<8x8xbf16>, vector<16x8xbf16>, vector<8x16xf32> -> vector<8x16xf32>
    %cst_32 = arith.constant -1.000000e+10 : f32
    %58 = vector.shape_cast %12 : vector<1x16xi1> to vector<1x16xi1>
    %59 = vector.broadcast %58 : vector<1x16xi1> to vector<8x16xi1>
    %60 = vector.broadcast %cst_32 : f32 to vector<8x16xf32>
    %61 = arith.select %59, %57, %60 : vector<8x16xi1>, vector<8x16xf32>
    %cst_33 = arith.constant dense<0xFF800000> : vector<8xf32>
    %62 = vector.multi_reduction <maximumf>, %61, %cst_33 [1] : vector<8x16xf32> to vector<8xf32>
    %63 = vector.shape_cast %62 : vector<8xf32> to vector<8x1xf32>
    %64 = vector.broadcast %63 : vector<8x1xf32> to vector<8x16xf32>
    %65 = arith.subf %61, %64 : vector<8x16xf32>
    %66 = math.exp %65 : vector<8x16xf32>
    %cst_34 = arith.constant dense<0.000000e+00> : vector<8xf32>
    %67 = vector.multi_reduction <add>, %66, %cst_34 [1] : vector<8x16xf32> to vector<8xf32>
    %68 = vector.shape_cast %67 : vector<8xf32> to vector<8x1xf32>
    %69 = tpu.reciprocal %68 {approx = true} : vector<8x1xf32> -> vector<8x1xf32>
    %70 = vector.broadcast %69 : vector<8x1xf32> to vector<8x16xf32>
    %71 = arith.mulf %66, %70 : vector<8x16xf32>
    %72 = arith.truncf %71 : vector<8x16xf32> to vector<8x16xbf16>
    %cst_35 = arith.constant dense<0.000000e+00> : vector<8x8xf32>
    %73 = tpu.matmul %72, %56, %cst_35 {dimension_numbers = #tpu.dot_dimension_numbers<[1], [0], [0], [1], [0, 0, 1, 1], [], []>} : vector<8x16xbf16>, vector<16x8xbf16>, vector<8x8xf32> -> vector<8x8xf32>
    %74 = arith.truncf %73 : vector<8x8xf32> to vector<8x8xbf16>
    %c0_36 = arith.constant 0 : index
    %c0_37 = arith.constant 0 : index
    %75 = vector.load %arg13[%c0_36, %c0_37] : memref<32x32xbf16, #tpu.memory_space<vmem>>, vector<8x32xbf16>
    %cst_38 = arith.constant dense<0.000000e+00> : vector<8x32xf32>
    %76 = tpu.matmul %74, %75, %cst_38 {dimension_numbers = #tpu.dot_dimension_numbers<[1], [0], [0], [1], [0, 0, 1, 1], [], []>} : vector<8x8xbf16>, vector<8x32xbf16>, vector<8x32xf32> -> vector<8x32xf32>
    %77 = arith.addf %53, %76 : vector<8x32xf32>
    %c0_39 = arith.constant 0 : index
    %c8 = arith.constant 8 : index
    %78 = vector.load %arg24[%c0_39, %c8] : memref<8x32xbf16, #tpu.memory_space<vmem>>, vector<8x8xbf16>
    %c0_40 = arith.constant 0 : index
    %c8_41 = arith.constant 8 : index
    %79 = vector.load %arg22[%c0_40, %c8_41] : memref<16x32xbf16, #tpu.memory_space<vmem>>, vector<16x8xbf16>
    %c0_42 = arith.constant 0 : index
    %c8_43 = arith.constant 8 : index
    %80 = vector.load %arg23[%c0_42, %c8_43] : memref<16x32xbf16, #tpu.memory_space<vmem>>, vector<16x8xbf16>
    %cst_44 = arith.constant dense<0.000000e+00> : vector<8x16xf32>
    %81 = tpu.matmul %78, %79, %cst_44 {dimension_numbers = #tpu.dot_dimension_numbers<[1], [1], [0], [0], [0, 0, 1, 0], [], []>} : vector<8x8xbf16>, vector<16x8xbf16>, vector<8x16xf32> -> vector<8x16xf32>
    %cst_45 = arith.constant -1.000000e+10 : f32
    %82 = vector.shape_cast %12 : vector<1x16xi1> to vector<1x16xi1>
    %83 = vector.broadcast %82 : vector<1x16xi1> to vector<8x16xi1>
    %84 = vector.broadcast %cst_45 : f32 to vector<8x16xf32>
    %85 = arith.select %83, %81, %84 : vector<8x16xi1>, vector<8x16xf32>
    %cst_46 = arith.constant dense<0xFF800000> : vector<8xf32>
    %86 = vector.multi_reduction <maximumf>, %85, %cst_46 [1] : vector<8x16xf32> to vector<8xf32>
    %87 = vector.shape_cast %86 : vector<8xf32> to vector<8x1xf32>
    %88 = vector.broadcast %87 : vector<8x1xf32> to vector<8x16xf32>
    %89 = arith.subf %85, %88 : vector<8x16xf32>
    %90 = math.exp %89 : vector<8x16xf32>
    %cst_47 = arith.constant dense<0.000000e+00> : vector<8xf32>
    %91 = vector.multi_reduction <add>, %90, %cst_47 [1] : vector<8x16xf32> to vector<8xf32>
    %92 = vector.shape_cast %91 : vector<8xf32> to vector<8x1xf32>
    %93 = tpu.reciprocal %92 {approx = true} : vector<8x1xf32> -> vector<8x1xf32>
    %94 = vector.broadcast %93 : vector<8x1xf32> to vector<8x16xf32>
    %95 = arith.mulf %90, %94 : vector<8x16xf32>
    %96 = arith.truncf %95 : vector<8x16xf32> to vector<8x16xbf16>
    %cst_48 = arith.constant dense<0.000000e+00> : vector<8x8xf32>
    %97 = tpu.matmul %96, %80, %cst_48 {dimension_numbers = #tpu.dot_dimension_numbers<[1], [0], [0], [1], [0, 0, 1, 1], [], []>} : vector<8x16xbf16>, vector<16x8xbf16>, vector<8x8xf32> -> vector<8x8xf32>
    %98 = arith.truncf %97 : vector<8x8xf32> to vector<8x8xbf16>
    %c8_49 = arith.constant 8 : index
    %c0_50 = arith.constant 0 : index
    %99 = vector.load %arg13[%c8_49, %c0_50] : memref<32x32xbf16, #tpu.memory_space<vmem>>, vector<8x32xbf16>
    %cst_51 = arith.constant dense<0.000000e+00> : vector<8x32xf32>
    %100 = tpu.matmul %98, %99, %cst_51 {dimension_numbers = #tpu.dot_dimension_numbers<[1], [0], [0], [1], [0, 0, 1, 1], [], []>} : vector<8x8xbf16>, vector<8x32xbf16>, vector<8x32xf32> -> vector<8x32xf32>
    %101 = arith.addf %77, %100 : vector<8x32xf32>
    %c0_52 = arith.constant 0 : index
    %c16 = arith.constant 16 : index
    %102 = vector.load %arg24[%c0_52, %c16] : memref<8x32xbf16, #tpu.memory_space<vmem>>, vector<8x8xbf16>
    %c0_53 = arith.constant 0 : index
    %c16_54 = arith.constant 16 : index
    %103 = vector.load %arg22[%c0_53, %c16_54] : memref<16x32xbf16, #tpu.memory_space<vmem>>, vector<16x8xbf16>
    %c0_55 = arith.constant 0 : index
    %c16_56 = arith.constant 16 : index
    %104 = vector.load %arg23[%c0_55, %c16_56] : memref<16x32xbf16, #tpu.memory_space<vmem>>, vector<16x8xbf16>
    %cst_57 = arith.constant dense<0.000000e+00> : vector<8x16xf32>
    %105 = tpu.matmul %102, %103, %cst_57 {dimension_numbers = #tpu.dot_dimension_numbers<[1], [1], [0], [0], [0, 0, 1, 0], [], []>} : vector<8x8xbf16>, vector<16x8xbf16>, vector<8x16xf32> -> vector<8x16xf32>
    %cst_58 = arith.constant -1.000000e+10 : f32
    %106 = vector.shape_cast %12 : vector<1x16xi1> to vector<1x16xi1>
    %107 = vector.broadcast %106 : vector<1x16xi1> to vector<8x16xi1>
    %108 = vector.broadcast %cst_58 : f32 to vector<8x16xf32>
    %109 = arith.select %107, %105, %108 : vector<8x16xi1>, vector<8x16xf32>
    %cst_59 = arith.constant dense<0xFF800000> : vector<8xf32>
    %110 = vector.multi_reduction <maximumf>, %109, %cst_59 [1] : vector<8x16xf32> to vector<8xf32>
    %111 = vector.shape_cast %110 : vector<8xf32> to vector<8x1xf32>
    %112 = vector.broadcast %111 : vector<8x1xf32> to vector<8x16xf32>
    %113 = arith.subf %109, %112 : vector<8x16xf32>
    %114 = math.exp %113 : vector<8x16xf32>
    %cst_60 = arith.constant dense<0.000000e+00> : vector<8xf32>
    %115 = vector.multi_reduction <add>, %114, %cst_60 [1] : vector<8x16xf32> to vector<8xf32>
    %116 = vector.shape_cast %115 : vector<8xf32> to vector<8x1xf32>
    %117 = tpu.reciprocal %116 {approx = true} : vector<8x1xf32> -> vector<8x1xf32>
    %118 = vector.broadcast %117 : vector<8x1xf32> to vector<8x16xf32>
    %119 = arith.mulf %114, %118 : vector<8x16xf32>
    %120 = arith.truncf %119 : vector<8x16xf32> to vector<8x16xbf16>
    %cst_61 = arith.constant dense<0.000000e+00> : vector<8x8xf32>
    %121 = tpu.matmul %120, %104, %cst_61 {dimension_numbers = #tpu.dot_dimension_numbers<[1], [0], [0], [1], [0, 0, 1, 1], [], []>} : vector<8x16xbf16>, vector<16x8xbf16>, vector<8x8xf32> -> vector<8x8xf32>
    %122 = arith.truncf %121 : vector<8x8xf32> to vector<8x8xbf16>
    %c16_62 = arith.constant 16 : index
    %c0_63 = arith.constant 0 : index
    %123 = vector.load %arg13[%c16_62, %c0_63] : memref<32x32xbf16, #tpu.memory_space<vmem>>, vector<8x32xbf16>
    %cst_64 = arith.constant dense<0.000000e+00> : vector<8x32xf32>
    %124 = tpu.matmul %122, %123, %cst_64 {dimension_numbers = #tpu.dot_dimension_numbers<[1], [0], [0], [1], [0, 0, 1, 1], [], []>} : vector<8x8xbf16>, vector<8x32xbf16>, vector<8x32xf32> -> vector<8x32xf32>
    %125 = arith.addf %101, %124 : vector<8x32xf32>
    %c0_65 = arith.constant 0 : index
    %c24 = arith.constant 24 : index
    %126 = vector.load %arg24[%c0_65, %c24] : memref<8x32xbf16, #tpu.memory_space<vmem>>, vector<8x8xbf16>
    %c0_66 = arith.constant 0 : index
    %c24_67 = arith.constant 24 : index
    %127 = vector.load %arg22[%c0_66, %c24_67] : memref<16x32xbf16, #tpu.memory_space<vmem>>, vector<16x8xbf16>
    %c0_68 = arith.constant 0 : index
    %c24_69 = arith.constant 24 : index
    %128 = vector.load %arg23[%c0_68, %c24_69] : memref<16x32xbf16, #tpu.memory_space<vmem>>, vector<16x8xbf16>
    %cst_70 = arith.constant dense<0.000000e+00> : vector<8x16xf32>
    %129 = tpu.matmul %126, %127, %cst_70 {dimension_numbers = #tpu.dot_dimension_numbers<[1], [1], [0], [0], [0, 0, 1, 0], [], []>} : vector<8x8xbf16>, vector<16x8xbf16>, vector<8x16xf32> -> vector<8x16xf32>
    %cst_71 = arith.constant -1.000000e+10 : f32
    %130 = vector.shape_cast %12 : vector<1x16xi1> to vector<1x16xi1>
    %131 = vector.broadcast %130 : vector<1x16xi1> to vector<8x16xi1>
    %132 = vector.broadcast %cst_71 : f32 to vector<8x16xf32>
    %133 = arith.select %131, %129, %132 : vector<8x16xi1>, vector<8x16xf32>
    %cst_72 = arith.constant dense<0xFF800000> : vector<8xf32>
    %134 = vector.multi_reduction <maximumf>, %133, %cst_72 [1] : vector<8x16xf32> to vector<8xf32>
    %135 = vector.shape_cast %134 : vector<8xf32> to vector<8x1xf32>
    %136 = vector.broadcast %135 : vector<8x1xf32> to vector<8x16xf32>
    %137 = arith.subf %133, %136 : vector<8x16xf32>
    %138 = math.exp %137 : vector<8x16xf32>
    %cst_73 = arith.constant dense<0.000000e+00> : vector<8xf32>
    %139 = vector.multi_reduction <add>, %138, %cst_73 [1] : vector<8x16xf32> to vector<8xf32>
    %140 = vector.shape_cast %139 : vector<8xf32> to vector<8x1xf32>
    %141 = tpu.reciprocal %140 {approx = true} : vector<8x1xf32> -> vector<8x1xf32>
    %142 = vector.broadcast %141 : vector<8x1xf32> to vector<8x16xf32>
    %143 = arith.mulf %138, %142 : vector<8x16xf32>
    %144 = arith.truncf %143 : vector<8x16xf32> to vector<8x16xbf16>
    %cst_74 = arith.constant dense<0.000000e+00> : vector<8x8xf32>
    %145 = tpu.matmul %144, %128, %cst_74 {dimension_numbers = #tpu.dot_dimension_numbers<[1], [0], [0], [1], [0, 0, 1, 1], [], []>} : vector<8x16xbf16>, vector<16x8xbf16>, vector<8x8xf32> -> vector<8x8xf32>
    %146 = arith.truncf %145 : vector<8x8xf32> to vector<8x8xbf16>
    %c24_75 = arith.constant 24 : index
    %c0_76 = arith.constant 0 : index
    %147 = vector.load %arg13[%c24_75, %c0_76] : memref<32x32xbf16, #tpu.memory_space<vmem>>, vector<8x32xbf16>
    %cst_77 = arith.constant dense<0.000000e+00> : vector<8x32xf32>
    %148 = tpu.matmul %146, %147, %cst_77 {dimension_numbers = #tpu.dot_dimension_numbers<[1], [0], [0], [1], [0, 0, 1, 1], [], []>} : vector<8x8xbf16>, vector<8x32xbf16>, vector<8x32xf32> -> vector<8x32xf32>
    %149 = arith.addf %125, %148 : vector<8x32xf32>
    %c0_78 = arith.constant 0 : index
    %c0_79 = arith.constant 0 : index
    %150 = vector.load %arg15[%c0_78, %c0_79] : memref<1x32xf32, #tpu.memory_space<vmem>>, vector<1x32xf32>
    %151 = vector.shape_cast %150 : vector<1x32xf32> to vector<32xf32>
    %c0_80 = arith.constant 0 : index
    %c0_81 = arith.constant 0 : index
    %152 = vector.load %arg16[%c0_80, %c0_81] : memref<1x32xf32, #tpu.memory_space<vmem>>, vector<1x32xf32>
    %153 = vector.shape_cast %152 : vector<1x32xf32> to vector<32xf32>
    %cst_82 = arith.constant dense<0.000000e+00> : vector<8xf32>
    %154 = vector.multi_reduction <add>, %149, %cst_82 [1] : vector<8x32xf32> to vector<8xf32>
    %155 = vector.shape_cast %154 : vector<8xf32> to vector<8x1xf32>
    %cst_83 = arith.constant 3.200000e+01 : f32
    %156 = vector.broadcast %cst_83 : f32 to vector<8x1xf32>
    %157 = arith.divf %155, %156 : vector<8x1xf32>
    %158 = vector.broadcast %157 : vector<8x1xf32> to vector<8x32xf32>
    %159 = arith.subf %149, %158 : vector<8x32xf32>
    %160 = arith.mulf %159, %159 : vector<8x32xf32>
    %cst_84 = arith.constant dense<0.000000e+00> : vector<8xf32>
    %161 = vector.multi_reduction <add>, %160, %cst_84 [1] : vector<8x32xf32> to vector<8xf32>
    %162 = vector.shape_cast %161 : vector<8xf32> to vector<8x1xf32>
    %cst_85 = arith.constant 3.200000e+01 : f32
    %163 = vector.broadcast %cst_85 : f32 to vector<8x1xf32>
    %164 = arith.divf %162, %163 : vector<8x1xf32>
    %165 = vector.broadcast %157 : vector<8x1xf32> to vector<8x32xf32>
    %166 = arith.subf %149, %165 : vector<8x32xf32>
    %cst_86 = arith.constant 9.99999974E-6 : f32
    %167 = vector.broadcast %cst_86 : f32 to vector<8x1xf32>
    %168 = arith.addf %164, %167 : vector<8x1xf32>
    %169 = math.rsqrt %168 : vector<8x1xf32>
    %170 = vector.broadcast %169 : vector<8x1xf32> to vector<8x32xf32>
    %171 = arith.mulf %166, %170 : vector<8x32xf32>
    %172 = vector.shape_cast %151 : vector<32xf32> to vector<1x32xf32>
    %173 = vector.broadcast %172 : vector<1x32xf32> to vector<8x32xf32>
    %174 = arith.mulf %171, %173 : vector<8x32xf32>
    %175 = vector.shape_cast %153 : vector<32xf32> to vector<1x32xf32>
    %176 = vector.broadcast %175 : vector<1x32xf32> to vector<8x32xf32>
    %177 = arith.addf %174, %176 : vector<8x32xf32>
    %178 = arith.truncf %177 : vector<8x32xf32> to vector<8x32xbf16>
    %cst_87 = arith.constant 0.000000e+00 : f32
    %179 = vector.broadcast %cst_87 : f32 to vector<8x32xf32>
    %c0_88 = arith.constant 0 : index
    %c0_89 = arith.constant 0 : index
    %180 = vector.load %arg20[%c0_88, %c0_89] : memref<1x32xf32, #tpu.memory_space<vmem>>, vector<1x32xf32>
    %181 = vector.shape_cast %180 : vector<1x32xf32> to vector<32xf32>
    %182 = vector.shape_cast %181 : vector<32xf32> to vector<1x32xf32>
    %183 = vector.broadcast %182 : vector<1x32xf32> to vector<8x32xf32>
    %184 = arith.addf %179, %183 : vector<8x32xf32>
    %c0_90 = arith.constant 0 : index
    %c0_91 = arith.constant 0 : index
    %185 = vector.load %arg17[%c0_90, %c0_91] : memref<32x64xbf16, #tpu.memory_space<vmem>>, vector<32x64xbf16>
    %cst_92 = arith.constant dense<0.000000e+00> : vector<8x64xf32>
    %186 = tpu.matmul %178, %185, %cst_92 {dimension_numbers = #tpu.dot_dimension_numbers<[1], [0], [0], [1], [0, 0, 1, 1], [], []>} : vector<8x32xbf16>, vector<32x64xbf16>, vector<8x64xf32> -> vector<8x64xf32>
    %c0_93 = arith.constant 0 : index
    %c0_94 = arith.constant 0 : index
    %187 = vector.load %arg18[%c0_93, %c0_94] : memref<1x64xf32, #tpu.memory_space<vmem>>, vector<1x64xf32>
    %188 = vector.shape_cast %187 : vector<1x64xf32> to vector<64xf32>
    %189 = vector.shape_cast %188 : vector<64xf32> to vector<1x64xf32>
    %190 = vector.broadcast %189 : vector<1x64xf32> to vector<8x64xf32>
    %191 = arith.addf %186, %190 : vector<8x64xf32>
    %cst_95 = arith.constant 0.000000e+00 : f32
    %192 = vector.broadcast %cst_95 : f32 to vector<8x64xf32>
    %193 = arith.maximumf %191, %192 : vector<8x64xf32>
    %194 = arith.truncf %193 : vector<8x64xf32> to vector<8x64xbf16>
    %c0_96 = arith.constant 0 : index
    %c0_97 = arith.constant 0 : index
    %195 = vector.load %arg19[%c0_96, %c0_97] : memref<64x32xbf16, #tpu.memory_space<vmem>>, vector<64x32xbf16>
    %cst_98 = arith.constant dense<0.000000e+00> : vector<8x32xf32>
    %196 = tpu.matmul %194, %195, %cst_98 {dimension_numbers = #tpu.dot_dimension_numbers<[1], [0], [0], [1], [0, 0, 1, 1], [], []>} : vector<8x64xbf16>, vector<64x32xbf16>, vector<8x32xf32> -> vector<8x32xf32>
    %197 = arith.addf %184, %196 : vector<8x32xf32>
    %198 = arith.addf %149, %197 : vector<8x32xf32>
    %c0_99 = arith.constant 0 : index
    %c0_100 = arith.constant 0 : index
    %c0_101 = arith.constant 0 : index
    %199 = vector.load %arg21[%c0_99, %c0_100, %c0_101] : memref<1x8x32xf32, #tpu.memory_space<vmem>>, vector<1x8x32xf32>
    %200 = vector.shape_cast %199 : vector<1x8x32xf32> to vector<8x32xf32>
    %201 = vector.shape_cast %198 : vector<8x32xf32> to vector<1x8x32xf32>
    tpu.vector_store %arg21[%c0_99, %c0_100, %c0_101], %201 {strides = array<i32>} : memref<1x8x32xf32, #tpu.memory_space<vmem>>, vector<1x8x32xf32>,
    return
  }
  func.func @transform_0(%arg0: i32, %arg1: i32) -> (i32, i32, i32) {
    %c0_i32 = arith.constant 0 : i32
    %c0_i32_0 = arith.constant 0 : i32
    return %arg0, %arg1, %c0_i32 : i32, i32, i32
  }
  func.func @transform_1(%arg0: i32, %arg1: i32) -> (i32, i32, i32) {
    %c0_i32 = arith.constant 0 : i32
    %c0_i32_0 = arith.constant 0 : i32
    %c0_i32_1 = arith.constant 0 : i32
    return %arg0, %c0_i32, %c0_i32_0 : i32, i32, i32
  }
  func.func @transform_2(%arg0: i32, %arg1: i32) -> (i32, i32, i32) {
    %c0_i32 = arith.constant 0 : i32
    %c0_i32_0 = arith.constant 0 : i32
    %c0_i32_1 = arith.constant 0 : i32
    return %arg0, %c0_i32, %c0_i32_0 : i32, i32, i32
  }
  func.func @transform_3(%arg0: i32, %arg1: i32) -> (i32, i32) {
    %c0_i32 = arith.constant 0 : i32
    %c0_i32_0 = arith.constant 0 : i32
    %c0_i32_1 = arith.constant 0 : i32
    return %c0_i32, %c0_i32_0 : i32, i32
  }
  func.func @transform_4(%arg0: i32, %arg1: i32) -> (i32, i32) {
    %c0_i32 = arith.constant 0 : i32
    %c0_i32_0 = arith.constant 0 : i32
    %c0_i32_1 = arith.constant 0 : i32
    return %c0_i32, %c0_i32_0 : i32, i32
  }
  func.func @transform_5(%arg0: i32, %arg1: i32) -> (i32, i32) {
    %c0_i32 = arith.constant 0 : i32
    %c0_i32_0 = arith.constant 0 : i32
    %c0_i32_1 = arith.constant 0 : i32
    return %c0_i32, %c0_i32_0 : i32, i32
  }
  func.func @transform_6(%arg0: i32, %arg1: i32) -> (i32, i32) {
    %c0_i32 = arith.constant 0 : i32
    %c0_i32_0 = arith.constant 0 : i32
    %c0_i32_1 = arith.constant 0 : i32
    return %c0_i32, %c0_i32_0 : i32, i32
  }
  func.func @transform_7(%arg0: i32, %arg1: i32) -> (i32, i32) {
    %c0_i32 = arith.constant 0 : i32
    %c0_i32_0 = arith.constant 0 : i32
    %c0_i32_1 = arith.constant 0 : i32
    return %c0_i32, %c0_i32_0 : i32, i32
  }
  func.func @transform_8(%arg0: i32, %arg1: i32) -> (i32, i32) {
    %c0_i32 = arith.constant 0 : i32
    %c0_i32_0 = arith.constant 0 : i32
    %c0_i32_1 = arith.constant 0 : i32
    return %c0_i32, %c0_i32_0 : i32, i32
  }
  func.func @transform_9(%arg0: i32, %arg1: i32) -> (i32, i32) {
    %c0_i32 = arith.constant 0 : i32
    %c0_i32_0 = arith.constant 0 : i32
    %c0_i32_1 = arith.constant 0 : i32
    return %c0_i32, %c0_i32_0 : i32, i32
  }
  func.func @transform_10(%arg0: i32, %arg1: i32) -> (i32, i32) {
    %c0_i32 = arith.constant 0 : i32
    %c0_i32_0 = arith.constant 0 : i32
    %c0_i32_1 = arith.constant 0 : i32
    return %c0_i32, %c0_i32_0 : i32, i32
  }
  func.func @transform_11(%arg0: i32, %arg1: i32) -> (i32, i32) {
    %c0_i32 = arith.constant 0 : i32
    %c0_i32_0 = arith.constant 0 : i32
    %c0_i32_1 = arith.constant 0 : i32
    return %c0_i32, %c0_i32_0 : i32, i32
  }
  func.func @transform_12(%arg0: i32, %arg1: i32) -> (i32, i32) {
    %c0_i32 = arith.constant 0 : i32
    %c0_i32_0 = arith.constant 0 : i32
    %c0_i32_1 = arith.constant 0 : i32
    return %c0_i32, %c0_i32_0 : i32, i32
  }
  func.func @transform_13(%arg0: i32, %arg1: i32) -> (i32, i32) {
    %c0_i32 = arith.constant 0 : i32
    %c0_i32_0 = arith.constant 0 : i32
    %c0_i32_1 = arith.constant 0 : i32
    return %c0_i32, %c0_i32_0 : i32, i32
  }
  func.func @transform_14(%arg0: i32, %arg1: i32) -> (i32, i32) {
    %c0_i32 = arith.constant 0 : i32
    %c0_i32_0 = arith.constant 0 : i32
    %c0_i32_1 = arith.constant 0 : i32
    return %c0_i32, %c0_i32_0 : i32, i32
  }
  func.func @transform_15(%arg0: i32, %arg1: i32) -> (i32, i32) {
    %c0_i32 = arith.constant 0 : i32
    %c0_i32_0 = arith.constant 0 : i32
    %c0_i32_1 = arith.constant 0 : i32
    return %c0_i32, %c0_i32_0 : i32, i32
  }
  func.func @transform_16(%arg0: i32, %arg1: i32) -> (i32, i32) {
    %c0_i32 = arith.constant 0 : i32
    %c0_i32_0 = arith.constant 0 : i32
    %c0_i32_1 = arith.constant 0 : i32
    return %c0_i32, %c0_i32_0 : i32, i32
  }
  func.func @transform_17(%arg0: i32, %arg1: i32) -> (i32, i32) {
    %c0_i32 = arith.constant 0 : i32
    %c0_i32_0 = arith.constant 0 : i32
    %c0_i32_1 = arith.constant 0 : i32
    return %c0_i32, %c0_i32_0 : i32, i32
  }
  func.func @transform_18(%arg0: i32, %arg1: i32) -> (i32, i32) {
    %c0_i32 = arith.constant 0 : i32
    %c0_i32_0 = arith.constant 0 : i32
    %c0_i32_1 = arith.constant 0 : i32
    return %c0_i32, %c0_i32_0 : i32, i32
  }
  func.func @transform_19(%arg0: i32, %arg1: i32) -> (i32, i32, i32) {
    %c0_i32 = arith.constant 0 : i32
    %c0_i32_0 = arith.constant 0 : i32
    return %arg0, %arg1, %c0_i32 : i32, i32, i32
  }
}

</mosaic_0001>

<llo_original>
// kernel: tpu_custom_call.1
$region0: #{tpu_custom_call.1}
  #allocation0 [shape = 'u32[]', space=smem, size = 0x4, offset = 0x4, fixed_abs, tag = 'smem constant byte address 0x4 - core index']
  #allocation1 [shape = 'u32[144,128]{1,0:T(1,128)}', space=vmem, size = 0x12000, scoped, tag = 'internal scratch']
  #allocation2 [shape = 'bf16[16,32]{1,0:T(16,128)(2,1)}', space=vmem, size = 0x1000, scoped, tag = 'scratch operand']
  #allocation3 [shape = 'bf16[16,32]{1,0:T(16,128)(2,1)}', space=vmem, size = 0x1000, scoped, tag = 'scratch operand']
  #allocation4 [shape = 'bf16[8,32]{1,0:T(8,128)(2,1)}', space=vmem, size = 0x800, scoped, tag = 'scratch operand']
  %s0 = inlined_call_operand.hbm [shape: f32[2,16,32], index: 0, kind: input, shape index: {}]
  %s1 = inlined_call_operand.hbm [shape: f32[2,16,32], index: 1, kind: input, shape index: {}]
  %s2 = inlined_call_operand.hbm [shape: f32[2,1,16], index: 2, kind: input, shape index: {}]
  %s3 = inlined_call_operand.hbm [shape: f32[1,32], index: 3, kind: input, shape index: {}]
  %s4 = inlined_call_operand.hbm [shape: f32[1,32], index: 4, kind: input, shape index: {}]
  %s5 = inlined_call_operand.hbm [shape: bf16[32,32], index: 5, kind: input, shape index: {}]
  %s6 = inlined_call_operand.hbm [shape: f32[1,32], index: 6, kind: input, shape index: {}]
  %s7 = inlined_call_operand.hbm [shape: bf16[32,32], index: 7, kind: input, shape index: {}]
  %s8 = inlined_call_operand.hbm [shape: f32[1,32], index: 8, kind: input, shape index: {}]
  %s9 = inlined_call_operand.hbm [shape: bf16[32,32], index: 9, kind: input, shape index: {}]
  %s10 = inlined_call_operand.hbm [shape: f32[1,32], index: 10, kind: input, shape index: {}]
  %s11 = inlined_call_operand.hbm [shape: bf16[32,32], index: 11, kind: input, shape index: {}]
  %s12 = inlined_call_operand.hbm [shape: f32[1,32], index: 12, kind: input, shape index: {}]
  %s13 = inlined_call_operand.hbm [shape: f32[1,32], index: 13, kind: input, shape index: {}]
  %s14 = inlined_call_operand.hbm [shape: f32[1,32], index: 14, kind: input, shape index: {}]
  %s15 = inlined_call_operand.hbm [shape: bf16[32,64], index: 15, kind: input, shape index: {}]
  %s16 = inlined_call_operand.hbm [shape: f32[1,64], index: 16, kind: input, shape index: {}]
  %s17 = inlined_call_operand.hbm [shape: bf16[64,32], index: 17, kind: input, shape index: {}]
  %s18 = inlined_call_operand.hbm [shape: f32[1,32], index: 18, kind: input, shape index: {}]
  %s19 = inlined_call_operand.hbm [shape: f32[2,16,32], index: 19, kind: output, shape index: {}]
  %s20 = sld [smem:[#allocation0]]
  $region189: #{tpu_custom_call.1} parent=0
    _
  %s22 = ssub.s32 1, %s20
  %s23 = scalar_select 0, %s22, %s20
  $region1: #{tpu_custom_call.1} parent=0
    #allocation5 [shape = 'u8[8192]{0}', space=vmem, size = 0x2000, scoped, tag = 'input window, operand 0']
    #allocation6 [shape = 's32[2]{0}', space=sflag, size = 0x8, scoped, tag = 'scoped memory for tpu_custom_call.1']
    #allocation7 [shape = 's32[2]{0}', space=sflag, size = 0x8, scoped, tag = 'scoped memory for tpu_custom_call.1']
    #allocation8 [shape = 'u8[16384]{0}', space=vmem, size = 0x4000, scoped, tag = 'input window, operand 1']
    #allocation9 [shape = 's32[2]{0}', space=sflag, size = 0x8, scoped, tag = 'scoped memory for tpu_custom_call.1']
    #allocation10 [shape = 'u8[1024]{0}', space=vmem, size = 0x400, scoped, tag = 'input window, operand 2']
    #allocation11 [shape = 'u8[512]{0}', space=vmem, size = 0x400, scoped, tag = 'input window, operand 3, single buffered']
    #allocation12 [shape = 's32[1]{0}', space=sflag, size = 0x4, scoped, tag = 'scoped memory for tpu_custom_call.1']
    #allocation13 [shape = 'u8[512]{0}', space=vmem, size = 0x400, scoped, tag = 'input window, operand 4, single buffered']
    #allocation14 [shape = 'u8[8192]{0}', space=vmem, size = 0x2000, scoped, tag = 'input window, operand 5, single buffered']
    #allocation15 [shape = 's32[1]{0}', space=sflag, size = 0x4, scoped, tag = 'scoped memory for tpu_custom_call.1']
    #allocation16 [shape = 'u8[512]{0}', space=vmem, size = 0x400, scoped, tag = 'input window, operand 6, single buffered']
    #allocation17 [shape = 'u8[8192]{0}', space=vmem, size = 0x2000, scoped, tag = 'input window, operand 7, single buffered']
    #allocation18 [shape = 's32[1]{0}', space=sflag, size = 0x4, scoped, tag = 'scoped memory for tpu_custom_call.1']
    #allocation19 [shape = 'u8[512]{0}', space=vmem, size = 0x400, scoped, tag = 'input window, operand 8, single buffered']
    #allocation20 [shape = 'u8[8192]{0}', space=vmem, size = 0x2000, scoped, tag = 'input window, operand 9, single buffered']
    #allocation21 [shape = 's32[1]{0}', space=sflag, size = 0x4, scoped, tag = 'scoped memory for tpu_custom_call.1']
    #allocation22 [shape = 'u8[512]{0}', space=vmem, size = 0x400, scoped, tag = 'input window, operand 10, single buffered']
    #allocation23 [shape = 'u8[8192]{0}', space=vmem, size = 0x2000, scoped, tag = 'input window, operand 11, single buffered']
    #allocation24 [shape = 's32[1]{0}', space=sflag, size = 0x4, scoped, tag = 'scoped memory for tpu_custom_call.1']
    #allocation25 [shape = 'u8[512]{0}', space=vmem, size = 0x400, scoped, tag = 'input window, operand 12, single buffered']
    #allocation26 [shape = 'u8[512]{0}', space=vmem, size = 0x400, scoped, tag = 'input window, operand 13, single buffered']
    #allocation27 [shape = 's32[1]{0}', space=sflag, size = 0x4, scoped, tag = 'scoped memory for tpu_custom_call.1']
    #allocation28 [shape = 'u8[512]{0}', space=vmem, size = 0x400, scoped, tag = 'input window, operand 14, single buffered']
    #allocation29 [shape = 'u8[8192]{0}', space=vmem, size = 0x2000, scoped, tag = 'input window, operand 15, single buffered']
    #allocation30 [shape = 's32[1]{0}', space=sflag, size = 0x4, scoped, tag = 'scoped memory for tpu_custom_call.1']
    #allocation31 [shape = 'u8[512]{0}', space=vmem, size = 0x400, scoped, tag = 'input window, operand 16, single buffered']
    #allocation32 [shape = 'u8[16384]{0}', space=vmem, size = 0x4000, scoped, tag = 'input window, operand 17, single buffered']
    #allocation33 [shape = 's32[1]{0}', space=sflag, size = 0x4, scoped, tag = 'scoped memory for tpu_custom_call.1']
    #allocation34 [shape = 'u8[512]{0}', space=vmem, size = 0x400, scoped, tag = 'input window, operand 18, single buffered']
    #allocation35 [shape = 'u8[8192]{0}', space=vmem, size = 0x2000, scoped, tag = 'output window, operand 0']
    %24 = vsyncpa [#allocation6], 0
    %s25 = scalar_lea.sflag [#allocation6], 1
    %26 = vsyncpa %s25, 0
    %27 = vsyncpa [#allocation9], 0
    %s28 = scalar_lea.sflag [#allocation9], 1
    %29 = vsyncpa %s28, 0
    %30 = vsyncpa [#allocation12], 0
    %31 = vsyncpa [#allocation15], 0
    %32 = vsyncpa [#allocation18], 0
    %33 = vsyncpa [#allocation21], 0
    %34 = vsyncpa [#allocation24], 0
    %35 = vsyncpa [#allocation27], 0
    %36 = vsyncpa [#allocation30], 0
    %37 = vsyncpa [#allocation33], 0
    %38 = vsyncpa [#allocation7], 0
    %s39 = scalar_lea.sflag [#allocation7], 1
    %40 = vsyncpa %s39, 0
    loop: start=0, step=1, limit=6
    $region2: #{tpu_custom_call.1} parent=1 // loop_pre_header
      _
    $region3: #{tpu_custom_call.1} parent=1 // loop_header
      %s42 = sphi 0, %s46
      %p43 = scmp.ge.s32.totalorder %s42, 6
      %s49 = sphi 0, %s61
      %s50 = sphi 0, %s57
      %s51 = sphi 0, %s49
      %s52 = sphi 0, %s50
      %s53 = sphi 0, %s51
      %s54 = sphi 0, %s52
      %s66 = sphi 0, %s68
      %s69 = sphi 0, %s66
      %s70 = sphi 0, %s69
      %s86 = sphi 0, %s70
      %s92 = sphi 0, %s94
      %s95 = sphi 0, %s92
      %s96 = sphi 0, %s95
      %s112 = sphi 0, %s96
      %s118 = sphi 0, %s120
      %s121 = sphi 0, %s118
      %s122 = sphi 0, %s121
      %s138 = sphi 0, %s122
      %s142 = sphi 0, %s142
      %s144 = sphi 0, %s142
      %s145 = sphi 0, %s144
      %s159 = sphi 0, %s145
      %s163 = sphi 0, %s163
      %s165 = sphi 0, %s163
      %s166 = sphi 0, %s165
      %s180 = sphi 0, %s166
      %s184 = sphi 0, %s184
      %s186 = sphi 0, %s184
      %s187 = sphi 0, %s186
      %s201 = sphi 0, %s187
      %s205 = sphi 0, %s205
      %s207 = sphi 0, %s205
      %s208 = sphi 0, %s207
      %s222 = sphi 0, %s208
      %s226 = sphi 0, %s226
      %s228 = sphi 0, %s226
      %s229 = sphi 0, %s228
      %s243 = sphi 0, %s229
      %s247 = sphi 0, %s247
      %s249 = sphi 0, %s247
      %s250 = sphi 0, %s249
      %s264 = sphi 0, %s250
      %s268 = sphi 0, %s268
      %s270 = sphi 0, %s268
      %s271 = sphi 0, %s270
      %s285 = sphi 0, %s271
      %s289 = sphi 0, %s289
      %s291 = sphi 0, %s289
      %s292 = sphi 0, %s291
      %s306 = sphi 0, %s292
      %s310 = sphi 0, %s310
      %s312 = sphi 0, %s310
      %s313 = sphi 0, %s312
      %s327 = sphi 0, %s313
      %s331 = sphi 0, %s331
      %s333 = sphi 0, %s331
      %s334 = sphi 0, %s333
      %s348 = sphi 0, %s334
      %s352 = sphi 0, %s352
      %s354 = sphi 0, %s352
      %s355 = sphi 0, %s354
      %s369 = sphi 0, %s355
      %s373 = sphi 0, %s373
      %s375 = sphi 0, %s373
      %s376 = sphi 0, %s375
      %s390 = sphi 0, %s376
      %s394 = sphi 0, %s394
      %s396 = sphi 0, %s394
      %s397 = sphi 0, %s396
      %s411 = sphi 0, %s397
      %s415 = sphi 0, %s415
      %s417 = sphi 0, %s415
      %s418 = sphi 0, %s417
      %s432 = sphi 0, %s418
      %s436 = sphi 0, %s436
      %s438 = sphi 0, %s436
      %s439 = sphi 0, %s438
      %s453 = sphi 0, %s439
      %s457 = sphi 0, %s457
      %s459 = sphi 0, %s457
      %s460 = sphi 0, %s459
      %s474 = sphi 0, %s460
      %s482 = sphi 0, %s484
      %s485 = sphi 0, %s482
      %s486 = sphi 0, %s485
      %s502 = sphi 0, %s486
    $region4: #{tpu_custom_call.1} parent=1 // loop_header_branch
      %45 = sbr.rel (%p43) target = $region8
    $region5: #{tpu_custom_call.1} parent=1 // loop_body
      %s47 = ssub.s32 %s42, 1
      %s48 = ssub.s32 %s42, 2
      %s55 = sadd.s32 1, %s50
      %p56 = scmp.ge.s32.totalorder %s55, 2
      %s57 = scalar_select %p56, 0, %s55
      %s58 = sadd.s32 1, %s49
      %s59 = scalar_select %p56, %s58, %s49
      %p60 = scmp.ge.s32.totalorder %s59, 2
      %s61 = scalar_select %p60, 0, %s59
      %s62 = ssub.s32 %s49, %s61
      %s63 = ssub.s32 %s50, %s57
      %s64 = sor.u32 %s62, %s63
      %p65 = scmp.eq.s32.totalorder %s64, 0
      %s67 = sadd.s32 %s66, 1
      %s68 = scalar_select %p65, %s66, %s67
      %p71 = pneg %p65
      %p72 = scmp.eq.s32.totalorder %s42, 3
      %p73 = por %p71, %p72
      %p74 = scmp.ne.s32.totalorder %s66, %s69
      %p75 = scmp.eq.s32.totalorder %s42, 0
      %p76 = por %p74, %p75
      %p77 = scmp.ne.s32.totalorder %s66, %s69
      %p78 = scmp.eq.s32.totalorder %s47, 3
      %p79 = por %p77, %p78
      %p80 = scmp.ne.s32.totalorder %s69, %s70
      %p81 = scmp.eq.s32.totalorder %s47, 0
      %p82 = por %p80, %p81
      %p83 = scmp.ne.s32.totalorder %s69, %s70
      %p84 = scmp.eq.s32.totalorder %s48, 3
      %p85 = por %p83, %p84
      %p87 = scmp.ne.s32.totalorder %s70, %s86
      %p88 = scmp.eq.s32.totalorder %s48, 0
      %p89 = por %p87, %p88
      %s90 = ssub.s32 %s49, %s61
      %p91 = scmp.eq.s32.totalorder %s90, 0
      %s93 = sadd.s32 %s92, 1
      %s94 = scalar_select %p91, %s92, %s93
      %p97 = pneg %p91
      %p98 = scmp.eq.s32.totalorder %s42, 3
      %p99 = por %p97, %p98
      %p100 = scmp.ne.s32.totalorder %s92, %s95
      %p101 = scmp.eq.s32.totalorder %s42, 0
      %p102 = por %p100, %p101
      %p103 = scmp.ne.s32.totalorder %s92, %s95
      %p104 = scmp.eq.s32.totalorder %s47, 3
      %p105 = por %p103, %p104
      %p106 = scmp.ne.s32.totalorder %s95, %s96
      %p107 = scmp.eq.s32.totalorder %s47, 0
      %p108 = por %p106, %p107
      %p109 = scmp.ne.s32.totalorder %s95, %s96
      %p110 = scmp.eq.s32.totalorder %s48, 3
      %p111 = por %p109, %p110
      %p113 = scmp.ne.s32.totalorder %s96, %s112
      %p114 = scmp.eq.s32.totalorder %s48, 0
      %p115 = por %p113, %p114
      %s116 = ssub.s32 %s49, %s61
      %p117 = scmp.eq.s32.totalorder %s116, 0
      %s119 = sadd.s32 %s118, 1
      %s120 = scalar_select %p117, %s118, %s119
      %p123 = pneg %p117
      %p124 = scmp.eq.s32.totalorder %s42, 3
      %p125 = por %p123, %p124
      %p126 = scmp.ne.s32.totalorder %s118, %s121
      %p127 = scmp.eq.s32.totalorder %s42, 0
      %p128 = por %p126, %p127
      %p129 = scmp.ne.s32.totalorder %s118, %s121
      %p130 = scmp.eq.s32.totalorder %s47, 3
      %p131 = por %p129, %p130
      %p132 = scmp.ne.s32.totalorder %s121, %s122
      %p133 = scmp.eq.s32.totalorder %s47, 0
      %p134 = por %p132, %p133
      %p135 = scmp.ne.s32.totalorder %s121, %s122
      %p136 = scmp.eq.s32.totalorder %s48, 3
      %p137 = por %p135, %p136
      %p139 = scmp.ne.s32.totalorder %s122, %s138
      %p140 = scmp.eq.s32.totalorder %s48, 0
      %p141 = por %p139, %p140
      %s143 = sadd.s32 %s142, 1
      %p146 = scmp.eq.s32.totalorder %s42, 3
      %p147 = scmp.ne.s32.totalorder %s142, %s144
      %p148 = scmp.eq.s32.totalorder %s42, 0
      %p149 = por %p147, %p148
      %p150 = scmp.ne.s32.totalorder %s142, %s144
      %p151 = scmp.eq.s32.totalorder %s47, 3
      %p152 = por %p150, %p151
      %p153 = scmp.ne.s32.totalorder %s144, %s145
      %p154 = scmp.eq.s32.totalorder %s47, 0
      %p155 = por %p153, %p154
      %p156 = scmp.ne.s32.totalorder %s144, %s145
      %p157 = scmp.eq.s32.totalorder %s48, 3
      %p158 = por %p156, %p157
      %p160 = scmp.ne.s32.totalorder %s145, %s159
      %p161 = scmp.eq.s32.totalorder %s48, 0
      %p162 = por %p160, %p161
      %s164 = sadd.s32 %s163, 1
      %p167 = scmp.eq.s32.totalorder %s42, 3
      %p168 = scmp.ne.s32.totalorder %s163, %s165
      %p169 = scmp.eq.s32.totalorder %s42, 0
      %p170 = por %p168, %p169
      %p171 = scmp.ne.s32.totalorder %s163, %s165
      %p172 = scmp.eq.s32.totalorder %s47, 3
      %p173 = por %p171, %p172
      %p174 = scmp.ne.s32.totalorder %s165, %s166
      %p175 = scmp.eq.s32.totalorder %s47, 0
      %p176 = por %p174, %p175
      %p177 = scmp.ne.s32.totalorder %s165, %s166
      %p178 = scmp.eq.s32.totalorder %s48, 3
      %p179 = por %p177, %p178
      %p181 = scmp.ne.s32.totalorder %s166, %s180
      %p182 = scmp.eq.s32.totalorder %s48, 0
      %p183 = por %p181, %p182
      %s185 = sadd.s32 %s184, 1
      %p188 = scmp.eq.s32.totalorder %s42, 3
      %p189 = scmp.ne.s32.totalorder %s184, %s186
      %p190 = scmp.eq.s32.totalorder %s42, 0
      %p191 = por %p189, %p190
      %p192 = scmp.ne.s32.totalorder %s184, %s186
      %p193 = scmp.eq.s32.totalorder %s47, 3
      %p194 = por %p192, %p193
      %p195 = scmp.ne.s32.totalorder %s186, %s187
      %p196 = scmp.eq.s32.totalorder %s47, 0
      %p197 = por %p195, %p196
      %p198 = scmp.ne.s32.totalorder %s186, %s187
      %p199 = scmp.eq.s32.totalorder %s48, 3
      %p200 = por %p198, %p199
      %p202 = scmp.ne.s32.totalorder %s187, %s201
      %p203 = scmp.eq.s32.totalorder %s48, 0
      %p204 = por %p202, %p203
      %s206 = sadd.s32 %s205, 1
      %p209 = scmp.eq.s32.totalorder %s42, 3
      %p210 = scmp.ne.s32.totalorder %s205, %s207
      %p211 = scmp.eq.s32.totalorder %s42, 0
      %p212 = por %p210, %p211
      %p213 = scmp.ne.s32.totalorder %s205, %s207
      %p214 = scmp.eq.s32.totalorder %s47, 3
      %p215 = por %p213, %p214
      %p216 = scmp.ne.s32.totalorder %s207, %s208
      %p217 = scmp.eq.s32.totalorder %s47, 0
      %p218 = por %p216, %p217
      %p219 = scmp.ne.s32.totalorder %s207, %s208
      %p220 = scmp.eq.s32.totalorder %s48, 3
      %p221 = por %p219, %p220
      %p223 = scmp.ne.s32.totalorder %s208, %s222
      %p224 = scmp.eq.s32.totalorder %s48, 0
      %p225 = por %p223, %p224
      %s227 = sadd.s32 %s226, 1
      %p230 = scmp.eq.s32.totalorder %s42, 3
      %p231 = scmp.ne.s32.totalorder %s226, %s228
      %p232 = scmp.eq.s32.totalorder %s42, 0
      %p233 = por %p231, %p232
      %p234 = scmp.ne.s32.totalorder %s226, %s228
      %p235 = scmp.eq.s32.totalorder %s47, 3
      %p236 = por %p234, %p235
      %p237 = scmp.ne.s32.totalorder %s228, %s229
      %p238 = scmp.eq.s32.totalorder %s47, 0
      %p239 = por %p237, %p238
      %p240 = scmp.ne.s32.totalorder %s228, %s229
      %p241 = scmp.eq.s32.totalorder %s48, 3
      %p242 = por %p240, %p241
      %p244 = scmp.ne.s32.totalorder %s229, %s243
      %p245 = scmp.eq.s32.totalorder %s48, 0
      %p246 = por %p244, %p245
      %s248 = sadd.s32 %s247, 1
      %p251 = scmp.eq.s32.totalorder %s42, 3
      %p252 = scmp.ne.s32.totalorder %s247, %s249
      %p253 = scmp.eq.s32.totalorder %s42, 0
      %p254 = por %p252, %p253
      %p255 = scmp.ne.s32.totalorder %s247, %s249
      %p256 = scmp.eq.s32.totalorder %s47, 3
      %p257 = por %p255, %p256
      %p258 = scmp.ne.s32.totalorder %s249, %s250
      %p259 = scmp.eq.s32.totalorder %s47, 0
      %p260 = por %p258, %p259
      %p261 = scmp.ne.s32.totalorder %s249, %s250
      %p262 = scmp.eq.s32.totalorder %s48, 3
      %p263 = por %p261, %p262
      %p265 = scmp.ne.s32.totalorder %s250, %s264
      %p266 = scmp.eq.s32.totalorder %s48, 0
      %p267 = por %p265, %p266
      %s269 = sadd.s32 %s268, 1
      %p272 = scmp.eq.s32.totalorder %s42, 3
      %p273 = scmp.ne.s32.totalorder %s268, %s270
      %p274 = scmp.eq.s32.totalorder %s42, 0
      %p275 = por %p273, %p274
      %p276 = scmp.ne.s32.totalorder %s268, %s270
      %p277 = scmp.eq.s32.totalorder %s47, 3
      %p278 = por %p276, %p277
      %p279 = scmp.ne.s32.totalorder %s270, %s271
      %p280 = scmp.eq.s32.totalorder %s47, 0
      %p281 = por %p279, %p280
      %p282 = scmp.ne.s32.totalorder %s270, %s271
      %p283 = scmp.eq.s32.totalorder %s48, 3
      %p284 = por %p282, %p283
      %p286 = scmp.ne.s32.totalorder %s271, %s285
      %p287 = scmp.eq.s32.totalorder %s48, 0
      %p288 = por %p286, %p287
      %s290 = sadd.s32 %s289, 1
      %p293 = scmp.eq.s32.totalorder %s42, 3
      %p294 = scmp.ne.s32.totalorder %s289, %s291
      %p295 = scmp.eq.s32.totalorder %s42, 0
      %p296 = por %p294, %p295
      %p297 = scmp.ne.s32.totalorder %s289, %s291
      %p298 = scmp.eq.s32.totalorder %s47, 3
      %p299 = por %p297, %p298
      %p300 = scmp.ne.s32.totalorder %s291, %s292
      %p301 = scmp.eq.s32.totalorder %s47, 0
      %p302 = por %p300, %p301
      %p303 = scmp.ne.s32.totalorder %s291, %s292
      %p304 = scmp.eq.s32.totalorder %s48, 3
      %p305 = por %p303, %p304
      %p307 = scmp.ne.s32.totalorder %s292, %s306
      %p308 = scmp.eq.s32.totalorder %s48, 0
      %p309 = por %p307, %p308
      %s311 = sadd.s32 %s310, 1
      %p314 = scmp.eq.s32.totalorder %s42, 3
      %p315 = scmp.ne.s32.totalorder %s310, %s312
      %p316 = scmp.eq.s32.totalorder %s42, 0
      %p317 = por %p315, %p316
      %p318 = scmp.ne.s32.totalorder %s310, %s312
      %p319 = scmp.eq.s32.totalorder %s47, 3
      %p320 = por %p318, %p319
      %p321 = scmp.ne.s32.totalorder %s312, %s313
      %p322 = scmp.eq.s32.totalorder %s47, 0
      %p323 = por %p321, %p322
      %p324 = scmp.ne.s32.totalorder %s312, %s313
      %p325 = scmp.eq.s32.totalorder %s48, 3
      %p326 = por %p324, %p325
      %p328 = scmp.ne.s32.totalorder %s313, %s327
      %p329 = scmp.eq.s32.totalorder %s48, 0
      %p330 = por %p328, %p329
      %s332 = sadd.s32 %s331, 1
      %p335 = scmp.eq.s32.totalorder %s42, 3
      %p336 = scmp.ne.s32.totalorder %s331, %s333
      %p337 = scmp.eq.s32.totalorder %s42, 0
      %p338 = por %p336, %p337
      %p339 = scmp.ne.s32.totalorder %s331, %s333
      %p340 = scmp.eq.s32.totalorder %s47, 3
      %p341 = por %p339, %p340
      %p342 = scmp.ne.s32.totalorder %s333, %s334
      %p343 = scmp.eq.s32.totalorder %s47, 0
      %p344 = por %p342, %p343
      %p345 = scmp.ne.s32.totalorder %s333, %s334
      %p346 = scmp.eq.s32.totalorder %s48, 3
      %p347 = por %p345, %p346
      %p349 = scmp.ne.s32.totalorder %s334, %s348
      %p350 = scmp.eq.s32.totalorder %s48, 0
      %p351 = por %p349, %p350
      %s353 = sadd.s32 %s352, 1
      %p356 = scmp.eq.s32.totalorder %s42, 3
      %p357 = scmp.ne.s32.totalorder %s352, %s354
      %p358 = scmp.eq.s32.totalorder %s42, 0
      %p359 = por %p357, %p358
      %p360 = scmp.ne.s32.totalorder %s352, %s354
      %p361 = scmp.eq.s32.totalorder %s47, 3
      %p362 = por %p360, %p361
      %p363 = scmp.ne.s32.totalorder %s354, %s355
      %p364 = scmp.eq.s32.totalorder %s47, 0
      %p365 = por %p363, %p364
      %p366 = scmp.ne.s32.totalorder %s354, %s355
      %p367 = scmp.eq.s32.totalorder %s48, 3
      %p368 = por %p366, %p367
      %p370 = scmp.ne.s32.totalorder %s355, %s369
      %p371 = scmp.eq.s32.totalorder %s48, 0
      %p372 = por %p370, %p371
      %s374 = sadd.s32 %s373, 1
      %p377 = scmp.eq.s32.totalorder %s42, 3
      %p378 = scmp.ne.s32.totalorder %s373, %s375
      %p379 = scmp.eq.s32.totalorder %s42, 0
      %p380 = por %p378, %p379
      %p381 = scmp.ne.s32.totalorder %s373, %s375
      %p382 = scmp.eq.s32.totalorder %s47, 3
      %p383 = por %p381, %p382
      %p384 = scmp.ne.s32.totalorder %s375, %s376
      %p385 = scmp.eq.s32.totalorder %s47, 0
      %p386 = por %p384, %p385
      %p387 = scmp.ne.s32.totalorder %s375, %s376
      %p388 = scmp.eq.s32.totalorder %s48, 3
      %p389 = por %p387, %p388
      %p391 = scmp.ne.s32.totalorder %s376, %s390
      %p392 = scmp.eq.s32.totalorder %s48, 0
      %p393 = por %p391, %p392
      %s395 = sadd.s32 %s394, 1
      %p398 = scmp.eq.s32.totalorder %s42, 3
      %p399 = scmp.ne.s32.totalorder %s394, %s396
      %p400 = scmp.eq.s32.totalorder %s42, 0
      %p401 = por %p399, %p400
      %p402 = scmp.ne.s32.totalorder %s394, %s396
      %p403 = scmp.eq.s32.totalorder %s47, 3
      %p404 = por %p402, %p403
      %p405 = scmp.ne.s32.totalorder %s396, %s397
      %p406 = scmp.eq.s32.totalorder %s47, 0
      %p407 = por %p405, %p406
      %p408 = scmp.ne.s32.totalorder %s396, %s397
      %p409 = scmp.eq.s32.totalorder %s48, 3
      %p410 = por %p408, %p409
      %p412 = scmp.ne.s32.totalorder %s397, %s411
      %p413 = scmp.eq.s32.totalorder %s48, 0
      %p414 = por %p412, %p413
      %s416 = sadd.s32 %s415, 1
      %p419 = scmp.eq.s32.totalorder %s42, 3
      %p420 = scmp.ne.s32.totalorder %s415, %s417
      %p421 = scmp.eq.s32.totalorder %s42, 0
      %p422 = por %p420, %p421
      %p423 = scmp.ne.s32.totalorder %s415, %s417
      %p424 = scmp.eq.s32.totalorder %s47, 3
      %p425 = por %p423, %p424
      %p426 = scmp.ne.s32.totalorder %s417, %s418
      %p427 = scmp.eq.s32.totalorder %s47, 0
      %p428 = por %p426, %p427
      %p429 = scmp.ne.s32.totalorder %s417, %s418
      %p430 = scmp.eq.s32.totalorder %s48, 3
      %p431 = por %p429, %p430
      %p433 = scmp.ne.s32.totalorder %s418, %s432
      %p434 = scmp.eq.s32.totalorder %s48, 0
      %p435 = por %p433, %p434
      %s437 = sadd.s32 %s436, 1
      %p440 = scmp.eq.s32.totalorder %s42, 3
      %p441 = scmp.ne.s32.totalorder %s436, %s438
      %p442 = scmp.eq.s32.totalorder %s42, 0
      %p443 = por %p441, %p442
      %p444 = scmp.ne.s32.totalorder %s436, %s438
      %p445 = scmp.eq.s32.totalorder %s47, 3
      %p446 = por %p444, %p445
      %p447 = scmp.ne.s32.totalorder %s438, %s439
      %p448 = scmp.eq.s32.totalorder %s47, 0
      %p449 = por %p447, %p448
      %p450 = scmp.ne.s32.totalorder %s438, %s439
      %p451 = scmp.eq.s32.totalorder %s48, 3
      %p452 = por %p450, %p451
      %p454 = scmp.ne.s32.totalorder %s439, %s453
      %p455 = scmp.eq.s32.totalorder %s48, 0
      %p456 = por %p454, %p455
      %s458 = sadd.s32 %s457, 1
      %p461 = scmp.eq.s32.totalorder %s42, 3
      %p462 = scmp.ne.s32.totalorder %s457, %s459
      %p463 = scmp.eq.s32.totalorder %s42, 0
      %p464 = por %p462, %p463
      %p465 = scmp.ne.s32.totalorder %s457, %s459
      %p466 = scmp.eq.s32.totalorder %s47, 3
      %p467 = por %p465, %p466
      %p468 = scmp.ne.s32.totalorder %s459, %s460
      %p469 = scmp.eq.s32.totalorder %s47, 0
      %p470 = por %p468, %p469
      %p471 = scmp.ne.s32.totalorder %s459, %s460
      %p472 = scmp.eq.s32.totalorder %s48, 3
      %p473 = por %p471, %p472
      %p475 = scmp.ne.s32.totalorder %s460, %s474
      %p476 = scmp.eq.s32.totalorder %s48, 0
      %p477 = por %p475, %p476
      %s478 = ssub.s32 %s49, %s61
      %s479 = ssub.s32 %s50, %s57
      %s480 = sor.u32 %s478, %s479
      %p481 = scmp.eq.s32.totalorder %s480, 0
      %s483 = sadd.s32 %s482, 1
      %s484 = scalar_select %p481, %s482, %s483
      %p487 = pneg %p481
      %p488 = scmp.eq.s32.totalorder %s42, 3
      %p489 = por %p487, %p488
      %p490 = scmp.ne.s32.totalorder %s482, %s485
      %p491 = scmp.eq.s32.totalorder %s42, 0
      %p492 = por %p490, %p491
      %p493 = scmp.ne.s32.totalorder %s482, %s485
      %p494 = scmp.eq.s32.totalorder %s47, 3
      %p495 = por %p493, %p494
      %p496 = scmp.ne.s32.totalorder %s485, %s486
      %p497 = scmp.eq.s32.totalorder %s47, 0
      %p498 = por %p496, %p497
      %p499 = scmp.ne.s32.totalorder %s485, %s486
      %p500 = scmp.eq.s32.totalorder %s48, 3
      %p501 = por %p499, %p500
      %p503 = scmp.ne.s32.totalorder %s486, %s502
      %p504 = scmp.eq.s32.totalorder %s48, 0
      %p505 = por %p503, %p504
      %p506 = scmp.le.s32.totalorder 1, %s42
      %p507 = scmp.lt.s32.totalorder %s42, 5
      %p508 = pnand %p506, %p507
      %p509 = pneg %p508
      // Predicated region
      $region9: #{tpu_custom_call.1} parent=5 // pred_check
        _
      $region10: #{tpu_custom_call.1} parent=5 // pred_check_branch
        %511 = sbr.rel (%p508) target = $region12
      $region11: #{tpu_custom_call.1} parent=5 // pred_region
        %s512 = ssub.s32 %s42, 1
        // Predicated region
        $region13: #{tpu_custom_call.1} parent=11 // pred_check
          %p513 = pneg %p155
        $region14: #{tpu_custom_call.1} parent=11 // pred_check_branch
          %515 = sbr.rel (%p513) target = $region16
        $region15: #{tpu_custom_call.1} parent=11 // pred_region
          %s517 = ssub.s32 16, 16
          %518 = vsyncadd [#allocation12], %s517
          %s520 = sshll.u32 [#allocation11], 4
          %s521 = int_to_ptr.vmem [resolvable:$true] %s520
          %523 = dma.hbm_to_vmem [thread:$0]  %s3, 16, %s521, [#allocation12]
        $region16: #{tpu_custom_call.1} parent=11 // pred_fallthru
          _
        // Predicated region
        $region17: #{tpu_custom_call.1} parent=11 // pred_check
          %p524 = pneg %p176
        $region18: #{tpu_custom_call.1} parent=11 // pred_check_branch
          %526 = sbr.rel (%p524) target = $region20
        $region19: #{tpu_custom_call.1} parent=11 // pred_region
          %s528 = ssub.s32 16, 16
          %529 = vsyncadd [#allocation12], %s528
          %s531 = sshll.u32 [#allocation13], 4
          %s532 = int_to_ptr.vmem [resolvable:$true] %s531
          %534 = dma.hbm_to_vmem [thread:$0]  %s4, 16, %s532, [#allocation12]
        $region20: #{tpu_custom_call.1} parent=11 // pred_fallthru
          _
        // Predicated region
        $region21: #{tpu_custom_call.1} parent=11 // pred_check
          %p535 = pneg %p197
        $region22: #{tpu_custom_call.1} parent=11 // pred_check_branch
          %537 = sbr.rel (%p535) target = $region24
        $region23: #{tpu_custom_call.1} parent=11 // pred_region
          %s539 = ssub.s32 256, 256
          %540 = vsyncadd [#allocation15], %s539
          %s541 = sshll.u32 [#allocation14], 4
          %s542 = int_to_ptr.vmem [resolvable:$true] %s541
          %547 = dma.hbm_to_vmem [thread:$0]  %s5, 256, %s542, [#allocation15], 64, 64, 4
        $region24: #{tpu_custom_call.1} parent=11 // pred_fallthru
          _
        // Predicated region
        $region25: #{tpu_custom_call.1} parent=11 // pred_check
          %p548 = pneg %p218
        $region26: #{tpu_custom_call.1} parent=11 // pred_check_branch
          %550 = sbr.rel (%p548) target = $region28
        $region27: #{tpu_custom_call.1} parent=11 // pred_region
          %s552 = ssub.s32 16, 16
          %553 = vsyncadd [#allocation15], %s552
          %s555 = sshll.u32 [#allocation16], 4
          %s556 = int_to_ptr.vmem [resolvable:$true] %s555
          %558 = dma.hbm_to_vmem [thread:$0]  %s6, 16, %s556, [#allocation15]
        $region28: #{tpu_custom_call.1} parent=11 // pred_fallthru
          _
        // Predicated region
        $region29: #{tpu_custom_call.1} parent=11 // pred_check
          %p559 = pneg %p239
        $region30: #{tpu_custom_call.1} parent=11 // pred_check_branch
          %561 = sbr.rel (%p559) target = $region32
        $region31: #{tpu_custom_call.1} parent=11 // pred_region
          %s563 = ssub.s32 256, 256
          %564 = vsyncadd [#allocation18], %s563
          %s565 = sshll.u32 [#allocation17], 4
          %s566 = int_to_ptr.vmem [resolvable:$true] %s565
          %571 = dma.hbm_to_vmem [thread:$0]  %s7, 256, %s566, [#allocation18], 64, 64, 4
        $region32: #{tpu_custom_call.1} parent=11 // pred_fallthru
          _
        // Predicated region
        $region33: #{tpu_custom_call.1} parent=11 // pred_check
          %p572 = pneg %p260
        $region34: #{tpu_custom_call.1} parent=11 // pred_check_branch
          %574 = sbr.rel (%p572) target = $region36
        $region35: #{tpu_custom_call.1} parent=11 // pred_region
          %s576 = ssub.s32 16, 16
          %577 = vsyncadd [#allocation18], %s576
          %s579 = sshll.u32 [#allocation19], 4
          %s580 = int_to_ptr.vmem [resolvable:$true] %s579
          %582 = dma.hbm_to_vmem [thread:$0]  %s8, 16, %s580, [#allocation18]
        $region36: #{tpu_custom_call.1} parent=11 // pred_fallthru
          _
        // Predicated region
        $region37: #{tpu_custom_call.1} parent=11 // pred_check
          %p583 = pneg %p281
        $region38: #{tpu_custom_call.1} parent=11 // pred_check_branch
          %585 = sbr.rel (%p583) target = $region40
        $region39: #{tpu_custom_call.1} parent=11 // pred_region
          %s587 = ssub.s32 256, 256
          %588 = vsyncadd [#allocation21], %s587
          %s589 = sshll.u32 [#allocation20], 4
          %s590 = int_to_ptr.vmem [resolvable:$true] %s589
          %595 = dma.hbm_to_vmem [thread:$0]  %s9, 256, %s590, [#allocation21], 64, 64, 4
        $region40: #{tpu_custom_call.1} parent=11 // pred_fallthru
          _
        // Predicated region
        $region41: #{tpu_custom_call.1} parent=11 // pred_check
          %p596 = pneg %p302
        $region42: #{tpu_custom_call.1} parent=11 // pred_check_branch
          %598 = sbr.rel (%p596) target = $region44
        $region43: #{tpu_custom_call.1} parent=11 // pred_region
          %s600 = ssub.s32 16, 16
          %601 = vsyncadd [#allocation21], %s600
          %s603 = sshll.u32 [#allocation22], 4
          %s604 = int_to_ptr.vmem [resolvable:$true] %s603
          %606 = dma.hbm_to_vmem [thread:$0]  %s10, 16, %s604, [#allocation21]
        $region44: #{tpu_custom_call.1} parent=11 // pred_fallthru
          _
        // Predicated region
        $region45: #{tpu_custom_call.1} parent=11 // pred_check
          %p607 = pneg %p323
        $region46: #{tpu_custom_call.1} parent=11 // pred_check_branch
          %609 = sbr.rel (%p607) target = $region48
        $region47: #{tpu_custom_call.1} parent=11 // pred_region
          %s611 = ssub.s32 256, 256
          %612 = vsyncadd [#allocation24], %s611
          %s613 = sshll.u32 [#allocation23], 4
          %s614 = int_to_ptr.vmem [resolvable:$true] %s613
          %619 = dma.hbm_to_vmem [thread:$0]  %s11, 256, %s614, [#allocation24], 64, 64, 4
        $region48: #{tpu_custom_call.1} parent=11 // pred_fallthru
          _
        // Predicated region
        $region49: #{tpu_custom_call.1} parent=11 // pred_check
          %p620 = pneg %p344
        $region50: #{tpu_custom_call.1} parent=11 // pred_check_branch
          %622 = sbr.rel (%p620) target = $region52
        $region51: #{tpu_custom_call.1} parent=11 // pred_region
          %s624 = ssub.s32 16, 16
          %625 = vsyncadd [#allocation24], %s624
          %s627 = sshll.u32 [#allocation25], 4
          %s628 = int_to_ptr.vmem [resolvable:$true] %s627
          %630 = dma.hbm_to_vmem [thread:$0]  %s12, 16, %s628, [#allocation24]
        $region52: #{tpu_custom_call.1} parent=11 // pred_fallthru
          _
        // Predicated region
        $region53: #{tpu_custom_call.1} parent=11 // pred_check
          %p631 = pneg %p365
        $region54: #{tpu_custom_call.1} parent=11 // pred_check_branch
          %633 = sbr.rel (%p631) target = $region56
        $region55: #{tpu_custom_call.1} parent=11 // pred_region
          %s635 = ssub.s32 16, 16
          %636 = vsyncadd [#allocation27], %s635
          %s638 = sshll.u32 [#allocation26], 4
          %s639 = int_to_ptr.vmem [resolvable:$true] %s638
          %641 = dma.hbm_to_vmem [thread:$0]  %s13, 16, %s639, [#allocation27]
        $region56: #{tpu_custom_call.1} parent=11 // pred_fallthru
          _
        // Predicated region
        $region57: #{tpu_custom_call.1} parent=11 // pred_check
          %p642 = pneg %p386
        $region58: #{tpu_custom_call.1} parent=11 // pred_check_branch
          %644 = sbr.rel (%p642) target = $region60
        $region59: #{tpu_custom_call.1} parent=11 // pred_region
          %s646 = ssub.s32 16, 16
          %647 = vsyncadd [#allocation27], %s646
          %s649 = sshll.u32 [#allocation28], 4
          %s650 = int_to_ptr.vmem [resolvable:$true] %s649
          %652 = dma.hbm_to_vmem [thread:$0]  %s14, 16, %s650, [#allocation27]
        $region60: #{tpu_custom_call.1} parent=11 // pred_fallthru
          _
        // Predicated region
        $region61: #{tpu_custom_call.1} parent=11 // pred_check
          %p653 = pneg %p407
        $region62: #{tpu_custom_call.1} parent=11 // pred_check_branch
          %655 = sbr.rel (%p653) target = $region64
        $region63: #{tpu_custom_call.1} parent=11 // pred_region
          %s657 = ssub.s32 256, 256
          %658 = vsyncadd [#allocation30], %s657
          %s659 = sshll.u32 [#allocation29], 4
          %s660 = int_to_ptr.vmem [resolvable:$true] %s659
          %665 = dma.hbm_to_vmem [thread:$0]  %s15, 256, %s660, [#allocation30], 64, 64, 4
        $region64: #{tpu_custom_call.1} parent=11 // pred_fallthru
          _
        // Predicated region
        $region65: #{tpu_custom_call.1} parent=11 // pred_check
          %p666 = pneg %p428
        $region66: #{tpu_custom_call.1} parent=11 // pred_check_branch
          %668 = sbr.rel (%p666) target = $region68
        $region67: #{tpu_custom_call.1} parent=11 // pred_region
          %s670 = ssub.s32 16, 16
          %671 = vsyncadd [#allocation30], %s670
          %s673 = sshll.u32 [#allocation31], 4
          %s674 = int_to_ptr.vmem [resolvable:$true] %s673
          %676 = dma.hbm_to_vmem [thread:$0]  %s16, 16, %s674, [#allocation30]
        $region68: #{tpu_custom_call.1} parent=11 // pred_fallthru
          _
        // Predicated region
        $region69: #{tpu_custom_call.1} parent=11 // pred_check
          %p677 = pneg %p449
        $region70: #{tpu_custom_call.1} parent=11 // pred_check_branch
          %679 = sbr.rel (%p677) target = $region72
        $region71: #{tpu_custom_call.1} parent=11 // pred_region
          %s681 = ssub.s32 512, 512
          %682 = vsyncadd [#allocation33], %s681
          %s683 = sshll.u32 [#allocation32], 4
          %s684 = int_to_ptr.vmem [resolvable:$true] %s683
          %689 = dma.hbm_to_vmem [thread:$0]  %s17, 512, %s684, [#allocation33], 64, 64, 4
        $region72: #{tpu_custom_call.1} parent=11 // pred_fallthru
          _
        // Predicated region
        $region73: #{tpu_custom_call.1} parent=11 // pred_check
          %p690 = pneg %p470
        $region74: #{tpu_custom_call.1} parent=11 // pred_check_branch
          %692 = sbr.rel (%p690) target = $region76
        $region75: #{tpu_custom_call.1} parent=11 // pred_region
          %s694 = ssub.s32 16, 16
          %695 = vsyncadd [#allocation33], %s694
          %s697 = sshll.u32 [#allocation34], 4
          %s698 = int_to_ptr.vmem [resolvable:$true] %s697
          %700 = dma.hbm_to_vmem [thread:$0]  %s18, 16, %s698, [#allocation33]
        $region76: #{tpu_custom_call.1} parent=11 // pred_fallthru
          _
      $region12: #{tpu_custom_call.1} parent=5 // pred_fallthru
        _
      %p701 = scmp.lt.s32.totalorder %s42, 4
      // Predicated region
      $region77: #{tpu_custom_call.1} parent=5 // pred_check
        %p702 = pneg %p701
      $region78: #{tpu_custom_call.1} parent=5 // pred_check_branch
        %704 = sbr.rel (%p702) target = $region80
      $region79: #{tpu_custom_call.1} parent=5 // pred_region
        // Predicated region
        $region81: #{tpu_custom_call.1} parent=79 // pred_check
          %p705 = pneg %p76
        $region82: #{tpu_custom_call.1} parent=79 // pred_check_branch
          %707 = sbr.rel (%p705) target = $region84
        $region83: #{tpu_custom_call.1} parent=79 // pred_region
          %s708 = sand.u32 %s66, 1
          %s709 = scalar_lea.sflag [#allocation6], %s708
          %s710 = sand.u32 %s66, 1
          %s711 = smul.addr %s710, 8
          %s712 = scalar_lea.vmem [#allocation5], %s711
          %s714 = ssub.s32 128, 128
          %715 = vsyncadd %s709, %s714
          %s716 = smul.addr %s49, 2
          %s717 = sadd.s32 %s50, %s716
          %s718 = smul.addr %s717, 128
          %s719 = scalar_lea.hbm %s0, %s718
          %s721 = sshll.u32 %s712, 4
          %s722 = int_to_ptr.vmem [resolvable:$true] %s721
          %724 = dma.hbm_to_vmem [thread:$0]  %s719, 128, %s722, %s709
        $region84: #{tpu_custom_call.1} parent=79 // pred_fallthru
          _
        // Predicated region
        $region85: #{tpu_custom_call.1} parent=79 // pred_check
          %p725 = pneg %p102
        $region86: #{tpu_custom_call.1} parent=79 // pred_check_branch
          %727 = sbr.rel (%p725) target = $region88
        $region87: #{tpu_custom_call.1} parent=79 // pred_region
          %s728 = sand.u32 %s42, 1
          %s729 = scalar_lea.sflag [#allocation9], %s728
          %s730 = sand.u32 %s92, 1
          %s731 = smul.addr %s730, 16
          %s732 = scalar_lea.vmem [#allocation8], %s731
          %s734 = ssub.s32 256, 256
          %735 = vsyncadd %s729, %s734
          %s736 = smul.addr %s49, 2
          %s737 = smul.addr %s736, 128
          %s738 = scalar_lea.hbm %s1, %s737
          %s739 = sshll.u32 %s732, 4
          %s740 = int_to_ptr.vmem [resolvable:$true] %s739
          %745 = dma.hbm_to_vmem [thread:$0]  %s738, 256, %s740, %s729, 128, 128, 8
        $region88: #{tpu_custom_call.1} parent=79 // pred_fallthru
          _
        // Predicated region
        $region89: #{tpu_custom_call.1} parent=79 // pred_check
          %p746 = pneg %p128
        $region90: #{tpu_custom_call.1} parent=79 // pred_check_branch
          %748 = sbr.rel (%p746) target = $region92
        $region91: #{tpu_custom_call.1} parent=79 // pred_region
          %s749 = sand.u32 %s42, 1
          %s750 = scalar_lea.sflag [#allocation9], %s749
          %s751 = sand.u32 %s118, 1
          %s752 = scalar_lea.vmem [#allocation10], %s751
          %s754 = ssub.s32 16, 16
          %755 = vsyncadd %s750, %s754
          %s756 = smul.addr %s49, 16
          %s757 = scalar_lea.hbm %s2, %s756
          %s759 = sshll.u32 %s752, 4
          %s760 = int_to_ptr.vmem [resolvable:$true] %s759
          %762 = dma.hbm_to_vmem [thread:$0]  %s757, 16, %s760, %s750
        $region92: #{tpu_custom_call.1} parent=79 // pred_fallthru
          _
      $region80: #{tpu_custom_call.1} parent=5 // pred_fallthru
        _
      %p763 = scmp.le.s32.totalorder 1, %s42
      %p764 = scmp.lt.s32.totalorder %s42, 5
      %p765 = pnand %p763, %p764
      %p766 = pneg %p765
      // Predicated region
      $region93: #{tpu_custom_call.1} parent=5 // pred_check
        _
      $region94: #{tpu_custom_call.1} parent=5 // pred_check_branch
        %768 = sbr.rel (%p765) target = $region96
      $region95: #{tpu_custom_call.1} parent=5 // pred_region
        %s769 = ssub.s32 %s42, 1
        %s770 = sand.u32 %s69, 1
        %s771 = scalar_lea.sflag [#allocation6], %s770
        %s772 = sand.u32 %s69, 1
        %s773 = smul.addr %s772, 8
        %s774 = scalar_lea.vmem [#allocation5], %s773
        // Predicated region
        $region97: #{tpu_custom_call.1} parent=95 // pred_check
          %p775 = pneg %p82
        $region98: #{tpu_custom_call.1} parent=95 // pred_check_branch
          %777 = sbr.rel (%p775) target = $region100
        $region99: #{tpu_custom_call.1} parent=95 // pred_region
          %778 = dma.done %s771, 128
        $region100: #{tpu_custom_call.1} parent=95 // pred_fallthru
          _
        %s779 = sand.u32 %s47, 1
        %s780 = scalar_lea.sflag [#allocation9], %s779
        %s781 = sand.u32 %s95, 1
        %s782 = smul.addr %s781, 16
        %s783 = scalar_lea.vmem [#allocation8], %s782
        // Predicated region
        $region101: #{tpu_custom_call.1} parent=95 // pred_check
          %p784 = pneg %p108
        $region102: #{tpu_custom_call.1} parent=95 // pred_check_branch
          %786 = sbr.rel (%p784) target = $region104
        $region103: #{tpu_custom_call.1} parent=95 // pred_region
          %787 = dma.done %s780, 256
        $region104: #{tpu_custom_call.1} parent=95 // pred_fallthru
          _
        %s788 = sand.u32 %s47, 1
        %s789 = scalar_lea.sflag [#allocation9], %s788
        %s790 = sand.u32 %s121, 1
        %s791 = scalar_lea.vmem [#allocation10], %s790
        // Predicated region
        $region105: #{tpu_custom_call.1} parent=95 // pred_check
          %p792 = pneg %p134
        $region106: #{tpu_custom_call.1} parent=95 // pred_check_branch
          %794 = sbr.rel (%p792) target = $region108
        $region107: #{tpu_custom_call.1} parent=95 // pred_region
          %795 = dma.done %s789, 16
        $region108: #{tpu_custom_call.1} parent=95 // pred_fallthru
          _
        // Predicated region
        $region109: #{tpu_custom_call.1} parent=95 // pred_check
          %p796 = pneg %p155
        $region110: #{tpu_custom_call.1} parent=95 // pred_check_branch
          %798 = sbr.rel (%p796) target = $region112
        $region111: #{tpu_custom_call.1} parent=95 // pred_region
          %799 = dma.done [#allocation12], 16
        $region112: #{tpu_custom_call.1} parent=95 // pred_fallthru
          _
        // Predicated region
        $region113: #{tpu_custom_call.1} parent=95 // pred_check
          %p800 = pneg %p176
        $region114: #{tpu_custom_call.1} parent=95 // pred_check_branch
          %802 = sbr.rel (%p800) target = $region116
        $region115: #{tpu_custom_call.1} parent=95 // pred_region
          %803 = dma.done [#allocation12], 16
        $region116: #{tpu_custom_call.1} parent=95 // pred_fallthru
          _
        // Predicated region
        $region117: #{tpu_custom_call.1} parent=95 // pred_check
          %p804 = pneg %p197
        $region118: #{tpu_custom_call.1} parent=95 // pred_check_branch
          %806 = sbr.rel (%p804) target = $region120
        $region119: #{tpu_custom_call.1} parent=95 // pred_region
          %807 = dma.done [#allocation15], 256
        $region120: #{tpu_custom_call.1} parent=95 // pred_fallthru
          _
        // Predicated region
        $region121: #{tpu_custom_call.1} parent=95 // pred_check
          %p808 = pneg %p218
        $region122: #{tpu_custom_call.1} parent=95 // pred_check_branch
          %810 = sbr.rel (%p808) target = $region124
        $region123: #{tpu_custom_call.1} parent=95 // pred_region
          %811 = dma.done [#allocation15], 16
        $region124: #{tpu_custom_call.1} parent=95 // pred_fallthru
          _
        // Predicated region
        $region125: #{tpu_custom_call.1} parent=95 // pred_check
          %p812 = pneg %p239
        $region126: #{tpu_custom_call.1} parent=95 // pred_check_branch
          %814 = sbr.rel (%p812) target = $region128
        $region127: #{tpu_custom_call.1} parent=95 // pred_region
          %815 = dma.done [#allocation18], 256
        $region128: #{tpu_custom_call.1} parent=95 // pred_fallthru
          _
        // Predicated region
        $region129: #{tpu_custom_call.1} parent=95 // pred_check
          %p816 = pneg %p260
        $region130: #{tpu_custom_call.1} parent=95 // pred_check_branch
          %818 = sbr.rel (%p816) target = $region132
        $region131: #{tpu_custom_call.1} parent=95 // pred_region
          %819 = dma.done [#allocation18], 16
        $region132: #{tpu_custom_call.1} parent=95 // pred_fallthru
          _
        // Predicated region
        $region133: #{tpu_custom_call.1} parent=95 // pred_check
          %p820 = pneg %p281
        $region134: #{tpu_custom_call.1} parent=95 // pred_check_branch
          %822 = sbr.rel (%p820) target = $region136
        $region135: #{tpu_custom_call.1} parent=95 // pred_region
          %823 = dma.done [#allocation21], 256
        $region136: #{tpu_custom_call.1} parent=95 // pred_fallthru
          _
        // Predicated region
        $region137: #{tpu_custom_call.1} parent=95 // pred_check
          %p824 = pneg %p302
        $region138: #{tpu_custom_call.1} parent=95 // pred_check_branch
          %826 = sbr.rel (%p824) target = $region140
        $region139: #{tpu_custom_call.1} parent=95 // pred_region
          %827 = dma.done [#allocation21], 16
        $region140: #{tpu_custom_call.1} parent=95 // pred_fallthru
          _
        // Predicated region
        $region141: #{tpu_custom_call.1} parent=95 // pred_check
          %p828 = pneg %p323
        $region142: #{tpu_custom_call.1} parent=95 // pred_check_branch
          %830 = sbr.rel (%p828) target = $region144
        $region143: #{tpu_custom_call.1} parent=95 // pred_region
          %831 = dma.done [#allocation24], 256
        $region144: #{tpu_custom_call.1} parent=95 // pred_fallthru
          _
        // Predicated region
        $region145: #{tpu_custom_call.1} parent=95 // pred_check
          %p832 = pneg %p344
        $region146: #{tpu_custom_call.1} parent=95 // pred_check_branch
          %834 = sbr.rel (%p832) target = $region148
        $region147: #{tpu_custom_call.1} parent=95 // pred_region
          %835 = dma.done [#allocation24], 16
        $region148: #{tpu_custom_call.1} parent=95 // pred_fallthru
          _
        // Predicated region
        $region149: #{tpu_custom_call.1} parent=95 // pred_check
          %p836 = pneg %p365
        $region150: #{tpu_custom_call.1} parent=95 // pred_check_branch
          %838 = sbr.rel (%p836) target = $region152
        $region151: #{tpu_custom_call.1} parent=95 // pred_region
          %839 = dma.done [#allocation27], 16
        $region152: #{tpu_custom_call.1} parent=95 // pred_fallthru
          _
        // Predicated region
        $region153: #{tpu_custom_call.1} parent=95 // pred_check
          %p840 = pneg %p386
        $region154: #{tpu_custom_call.1} parent=95 // pred_check_branch
          %842 = sbr.rel (%p840) target = $region156
        $region155: #{tpu_custom_call.1} parent=95 // pred_region
          %843 = dma.done [#allocation27], 16
        $region156: #{tpu_custom_call.1} parent=95 // pred_fallthru
          _
        // Predicated region
        $region157: #{tpu_custom_call.1} parent=95 // pred_check
          %p844 = pneg %p407
        $region158: #{tpu_custom_call.1} parent=95 // pred_check_branch
          %846 = sbr.rel (%p844) target = $region160
        $region159: #{tpu_custom_call.1} parent=95 // pred_region
          %847 = dma.done [#allocation30], 256
        $region160: #{tpu_custom_call.1} parent=95 // pred_fallthru
          _
        // Predicated region
        $region161: #{tpu_custom_call.1} parent=95 // pred_check
          %p848 = pneg %p428
        $region162: #{tpu_custom_call.1} parent=95 // pred_check_branch
          %850 = sbr.rel (%p848) target = $region164
        $region163: #{tpu_custom_call.1} parent=95 // pred_region
          %851 = dma.done [#allocation30], 16
        $region164: #{tpu_custom_call.1} parent=95 // pred_fallthru
          _
        // Predicated region
        $region165: #{tpu_custom_call.1} parent=95 // pred_check
          %p852 = pneg %p449
        $region166: #{tpu_custom_call.1} parent=95 // pred_check_branch
          %854 = sbr.rel (%p852) target = $region168
        $region167: #{tpu_custom_call.1} parent=95 // pred_region
          %855 = dma.done [#allocation33], 512
        $region168: #{tpu_custom_call.1} parent=95 // pred_fallthru
          _
        // Predicated region
        $region169: #{tpu_custom_call.1} parent=95 // pred_check
          %p856 = pneg %p470
        $region170: #{tpu_custom_call.1} parent=95 // pred_check_branch
          %858 = sbr.rel (%p856) target = $region172
        $region171: #{tpu_custom_call.1} parent=95 // pred_region
          %859 = dma.done [#allocation33], 16
        $region172: #{tpu_custom_call.1} parent=95 // pred_fallthru
          _
        %s860 = sand.u32 %s69, 1
        %s861 = scalar_lea.sflag [#allocation6], %s860
        %s862 = sand.u32 %s69, 1
        %s863 = smul.addr %s862, 8
        %s864 = scalar_lea.vmem [#allocation5], %s863
        %p865 = pneg %p82
        %p866 = pneg %p79
        %s867 = sand.u32 %s47, 1
        %s868 = scalar_lea.sflag [#allocation9], %s867
        %s869 = sand.u32 %s95, 1
        %s870 = smul.addr %s869, 16
        %s871 = scalar_lea.vmem [#allocation8], %s870
        %p872 = pneg %p108
        %p873 = pneg %p105
        %s874 = sand.u32 %s47, 1
        %s875 = scalar_lea.sflag [#allocation9], %s874
        %s876 = sand.u32 %s121, 1
        %s877 = scalar_lea.vmem [#allocation10], %s876
        %p878 = pneg %p134
        %p879 = pneg %p131
        %p880 = pneg %p155
        %p881 = pneg %p152
        %p882 = pneg %p176
        %p883 = pneg %p173
        %p884 = pneg %p197
        %p885 = pneg %p194
        %p886 = pneg %p218
        %p887 = pneg %p215
        %p888 = pneg %p239
        %p889 = pneg %p236
        %p890 = pneg %p260
        %p891 = pneg %p257
        %p892 = pneg %p281
        %p893 = pneg %p278
        %p894 = pneg %p302
        %p895 = pneg %p299
        %p896 = pneg %p323
        %p897 = pneg %p320
        %p898 = pneg %p344
        %p899 = pneg %p341
        %p900 = pneg %p365
        %p901 = pneg %p362
        %p902 = pneg %p386
        %p903 = pneg %p383
        %p904 = pneg %p407
        %p905 = pneg %p404
        %p906 = pneg %p428
        %p907 = pneg %p425
        %p908 = pneg %p449
        %p909 = pneg %p446
        %p910 = pneg %p470
        %p911 = pneg %p467
        %p912 = pneg %p498
        %p913 = pneg %p495
        %s914 = sand.u32 %s485, 1
        %s915 = scalar_lea.sflag [#allocation7], %s914
        %s916 = sand.u32 %s485, 1
        %s917 = smul.addr %s916, 8
        %s918 = scalar_lea.vmem [#allocation35], %s917
        %v920 = vld [vmem:[#allocation11] sm:$0x1]
        %v921 = vld [vmem:[#allocation13] sm:$0x1]
        %p922 = scmp.eq.s32.totalorder %s52, 0
        // Predicated region
        $region173: #{tpu_custom_call.1} parent=95 // pred_check
          %p923 = pneg %p922
        $region174: #{tpu_custom_call.1} parent=95 // pred_check_branch
          %925 = sbr.rel (%p923) target = $region176
        $region175: #{tpu_custom_call.1} parent=95 // pred_region
          %v926 = vld [vmem:[%s783] sm:$0xff]
          %v927 = vld [vmem:[%s783 + $0x8] sm:$0xff]
          %vm928 = vcmask 261120
          %v929 = vsel %vm928, %v926, 0.0
          %930 = vadd.xlane.f32.xlu0 %v929
          %v931 = vpop.xlane.xlu0 %930
          %v932 = vsel %vm928, %v927, 0.0
          %933 = vadd.xlane.f32.xlu0 %v932
          %v934 = vpop.xlane.xlu0 %933
          %v935 = vrcp.pop 32.0
          %v936 = vmul.f32 %v931, %v935
          %v937 = vmul.f32 %v934, %v935
          %v938 = vsub.f32 %v926, %v936
          %v939 = vsub.f32 %v927, %v937
          %v940 = vmul.f32 %v938, %v938
          %v941 = vmul.f32 %v939, %v939
          %v942 = vsel %vm928, %v940, 0.0
          %943 = vadd.xlane.f32.xlu0 %v942
          %v944 = vpop.xlane.xlu0 %943
          %v945 = vsel %vm928, %v941, 0.0
          %946 = vadd.xlane.f32.xlu0 %v945
          %v947 = vpop.xlane.xlu0 %946
          %v948 = vmul.f32 %v944, %v935
          %v949 = vmul.f32 %v947, %v935
          %v950 = vadd.f32 %v948, 1e-05
          %v951 = vadd.f32 %v949, 1e-05
          %v952 = vrsqrt.pop %v950
          %v953 = vrsqrt.pop %v951
          %v954 = vmul.f32 %v938, %v952
          %v955 = vmul.f32 %v939, %v953
          %v957 = vlaneseq
          %v958 = vshrl.u32 %v957, 7
          %v959 = vsub.s32 0, %v958
          %v960 = vrot.slane %v920, %v959
          %v962 = vmul.f32 %v954, %v960
          %v963 = vmul.f32 %v955, %v960
          %v965 = vlaneseq
          %v966 = vshrl.u32 %v965, 7
          %v967 = vsub.s32 0, %v966
          %v968 = vrot.slane %v921, %v967
          %v970 = vadd.f32 %v962, %v968
          %v971 = vadd.f32 %v963, %v968
          %v972 = vpack.c.bf16 %v971, %v970
          %v973 = vld [vmem:[#allocation17] sm:$0xf]
          %v974 = vld [vmem:[#allocation17 + $0x4] sm:$0xf]
          %v975 = vld [vmem:[#allocation17 + $0x8] sm:$0xf]
          %v976 = vld [vmem:[#allocation17 + $0xc] sm:$0xf]
          %v977 = vld [vmem:[#allocation19] sm:$0x1]
          %v979 = vlaneseq
          %v980 = vshrl.u32 %v979, 7
          %v981 = vsub.s32 0, %v980
          %v982 = vrot.slane %v977, %v981
          %v988 = vunpack.c.l.b16 %v973
          %v989 = vunpack.c.l.b16 %v974
          %v990 = vunpack.c.l.b16 %v975
          %v991 = vunpack.c.l.b16 %v976
          %v992 = vpack.c.b16 %v989, %v988
          %v993 = vpack.c.b16 %v991, %v990
          %v997 = vsel %vm928, %v972, 0
          %999 = vmatprep.subr.bf16.mxu0 0
          %1000 = vmatpush1.bf16.msra.mxu0 %v992
          %1001 = vmatprep.subr.bf16.mxu0 0
          %1002 = vmatpush1.bf16.msra.mxu0 %v993
          %1003 = vmatprep.subr.bf16.mxu0 0
          %1004 = vmatpush1.bf16.msra.mxu0 0
          %1005 = vmatprep.subr.bf16.mxu0 0
          %1006 = vmatpush1.bf16.msra.mxu0 0
          %1007 = vmatprep.subr.bf16.mxu0 0
          %1008 = vmatpush1.bf16.msra.mxu0 0
          %1009 = vmatprep.subr.bf16.mxu0 0
          %1010 = vmatpush1.bf16.msra.mxu0 0
          %1011 = vmatprep.subr.bf16.mxu0 0
          %1012 = vmatpush1.bf16.msra.mxu0 0
          %1013 = vmatprep.subr.bf16.mxu0 0
          %1014 = vmatpush1.bf16.msra.mxu0 0
          %1015 = vmatprep.subr.bf16.mxu0 0
          %1016 = vmatpush1.bf16.msra.mxu0 0
          %1017 = vmatprep.subr.bf16.mxu0 0
          %1018 = vmatpush1.bf16.msra.mxu0 0
          %1019 = vmatprep.subr.bf16.mxu0 0
          %1020 = vmatpush1.bf16.msra.mxu0 0
          %1021 = vmatprep.subr.bf16.mxu0 0
          %1022 = vmatpush1.bf16.msra.mxu0 0
          %1023 = vmatprep.subr.bf16.mxu0 0
          %1024 = vmatpush1.bf16.msra.mxu0 0
          %1025 = vmatprep.subr.bf16.mxu0 0
          %1026 = vmatpush1.bf16.msra.mxu0 0
          %1027 = vmatprep.subr.bf16.mxu0 0
          %1028 = vmatpush1.bf16.msra.mxu0 0
          %1029 = vmatprep.subr.bf16.mxu0 0
          %1030 = vmatpush1.bf16.msra.mxu0 0
          %1031 = vmatprep.mubr.bf16.mxu0 0
          %1032 = vmatmul.mubr.bf16.gmra.mrb[0].mxu0 %v997
          %v1033 = vpop.f32.mrb[0].mxu0
          %v1034 = vadd.f32 %v982, %v1033
          %v1035 = vpop.f32.mrb[0].mxu0
          %v1036 = vpop.f32.mrb[0].mxu0
          %v1037 = vadd.f32 %v982, %v1036
          %v1038 = vpop.f32.mrb[0].mxu0
          %1039 = vdwg.mxu0
          %v1040 = vld [vmem:[#allocation20] sm:$0xf]
          %v1041 = vld [vmem:[#allocation20 + $0x4] sm:$0xf]
          %v1042 = vld [vmem:[#allocation20 + $0x8] sm:$0xf]
          %v1043 = vld [vmem:[#allocation20 + $0xc] sm:$0xf]
          %v1044 = vld [vmem:[#allocation22] sm:$0x1]
          %v1046 = vlaneseq
          %v1047 = vshrl.u32 %v1046, 7
          %v1048 = vsub.s32 0, %v1047
          %v1049 = vrot.slane %v1044, %v1048
          %v1055 = vunpack.c.l.b16 %v1040
          %v1056 = vunpack.c.l.b16 %v1041
          %v1057 = vunpack.c.l.b16 %v1042
          %v1058 = vunpack.c.l.b16 %v1043
          %v1059 = vpack.c.b16 %v1056, %v1055
          %v1060 = vpack.c.b16 %v1058, %v1057
          %1063 = vmatprep.subr.bf16.mxu0 0
          %1064 = vmatpush1.bf16.msra.mxu0 %v1059
          %1065 = vmatprep.subr.bf16.mxu0 0
          %1066 = vmatpush1.bf16.msra.mxu0 %v1060
          %1067 = vmatprep.subr.bf16.mxu0 0
          %1068 = vmatpush1.bf16.msra.mxu0 0
          %1069 = vmatprep.subr.bf16.mxu0 0
          %1070 = vmatpush1.bf16.msra.mxu0 0
          %1071 = vmatprep.subr.bf16.mxu0 0
          %1072 = vmatpush1.bf16.msra.mxu0 0
          %1073 = vmatprep.subr.bf16.mxu0 0
          %1074 = vmatpush1.bf16.msra.mxu0 0
          %1075 = vmatprep.subr.bf16.mxu0 0
          %1076 = vmatpush1.bf16.msra.mxu0 0
          %1077 = vmatprep.subr.bf16.mxu0 0
          %1078 = vmatpush1.bf16.msra.mxu0 0
          %1079 = vmatprep.subr.bf16.mxu0 0
          %1080 = vmatpush1.bf16.msra.mxu0 0
          %1081 = vmatprep.subr.bf16.mxu0 0
          %1082 = vmatpush1.bf16.msra.mxu0 0
          %1083 = vmatprep.subr.bf16.mxu0 0
          %1084 = vmatpush1.bf16.msra.mxu0 0
          %1085 = vmatprep.subr.bf16.mxu0 0
          %1086 = vmatpush1.bf16.msra.mxu0 0
          %1087 = vmatprep.subr.bf16.mxu0 0
          %1088 = vmatpush1.bf16.msra.mxu0 0
          %1089 = vmatprep.subr.bf16.mxu0 0
          %1090 = vmatpush1.bf16.msra.mxu0 0
          %1091 = vmatprep.subr.bf16.mxu0 0
          %1092 = vmatpush1.bf16.msra.mxu0 0
          %1093 = vmatprep.subr.bf16.mxu0 0
          %1094 = vmatpush1.bf16.msra.mxu0 0
          %1095 = vmatprep.mubr.bf16.mxu0 0
          %1096 = vmatmul.mubr.bf16.gmra.mrb[0].mxu0 %v997
          %v1097 = vpop.f32.mrb[0].mxu0
          %v1098 = vadd.f32 %v1049, %v1097
          %v1099 = vpop.f32.mrb[0].mxu0
          %v1100 = vpop.f32.mrb[0].mxu0
          %v1101 = vadd.f32 %v1049, %v1100
          %v1102 = vpop.f32.mrb[0].mxu0
          %1103 = vdwg.mxu0
          %v1104 = vpack.c.bf16 %v1037, %v1034
          %1105 = vst.msk [vmem:[#allocation2] sm:$0xff] %vm928, %v1104
          %v1106 = vpack.c.bf16 %v1101, %v1098
          %1107 = vst.msk [vmem:[#allocation3] sm:$0xff] %vm928, %v1106
        $region176: #{tpu_custom_call.1} parent=95 // pred_fallthru
          _
        %v1108 = vld [vmem:[%s774] sm:$0xff]
        %v1109 = vld [vmem:[%s791] sm:$0x1]
        %vm1110 = vcmp.gt.f32.partialorder %v1109, 0.0
        %vm1111 = vcmask 261120
        %v1112 = vsel %vm1111, %v1108, 0.0
        %1113 = vadd.xlane.f32.xlu0 %v1112
        %v1114 = vpop.xlane.xlu0 %1113
        %v1115 = vrcp.pop 32.0
        %v1116 = vmul.f32 %v1114, %v1115
        %v1117 = vsub.f32 %v1108, %v1116
        %v1118 = vmul.f32 %v1117, %v1117
        %v1119 = vsel %vm1111, %v1118, 0.0
        %1120 = vadd.xlane.f32.xlu0 %v1119
        %v1121 = vpop.xlane.xlu0 %1120
        %v1122 = vmul.f32 %v1121, %v1115
        %v1123 = vadd.f32 %v1122, 1e-05
        %v1124 = vrsqrt.pop %v1123
        %v1125 = vmul.f32 %v1117, %v1124
        %v1127 = vlaneseq
        %v1128 = vshrl.u32 %v1127, 7
        %v1129 = vsub.s32 0, %v1128
        %v1130 = vrot.slane %v920, %v1129
        %v1132 = vmul.f32 %v1125, %v1130
        %v1134 = vlaneseq
        %v1135 = vshrl.u32 %v1134, 7
        %v1136 = vsub.s32 0, %v1135
        %v1137 = vrot.slane %v921, %v1136
        %v1139 = vadd.f32 %v1132, %v1137
        %v1140 = vpack.c.bf16 %v1139, %v1139
        %v1141 = vld [vmem:[#allocation14] sm:$0xf]
        %v1142 = vld [vmem:[#allocation14 + $0x4] sm:$0xf]
        %v1143 = vld [vmem:[#allocation14 + $0x8] sm:$0xf]
        %v1144 = vld [vmem:[#allocation14 + $0xc] sm:$0xf]
        %v1145 = vld [vmem:[#allocation16] sm:$0x1]
        %v1147 = vlaneseq
        %v1148 = vshrl.u32 %v1147, 7
        %v1149 = vsub.s32 0, %v1148
        %v1150 = vrot.slane %v1145, %v1149
        %v1156 = vunpack.c.l.b16 %v1141
        %v1157 = vunpack.c.l.b16 %v1142
        %v1158 = vunpack.c.l.b16 %v1143
        %v1159 = vunpack.c.l.b16 %v1144
        %v1160 = vpack.c.b16 %v1157, %v1156
        %v1161 = vpack.c.b16 %v1159, %v1158
        %v1165 = vsel %vm1111, %v1140, 0
        %1167 = vmatprep.subr.bf16.mxu0 0
        %1168 = vmatpush1.bf16.msra.mxu0 %v1160
        %1169 = vmatprep.subr.bf16.mxu0 0
        %1170 = vmatpush1.bf16.msra.mxu0 %v1161
        %1171 = vmatprep.subr.bf16.mxu0 0
        %1172 = vmatpush1.bf16.msra.mxu0 0
        %1173 = vmatprep.subr.bf16.mxu0 0
        %1174 = vmatpush1.bf16.msra.mxu0 0
        %1175 = vmatprep.subr.bf16.mxu0 0
        %1176 = vmatpush1.bf16.msra.mxu0 0
        %1177 = vmatprep.subr.bf16.mxu0 0
        %1178 = vmatpush1.bf16.msra.mxu0 0
        %1179 = vmatprep.subr.bf16.mxu0 0
        %1180 = vmatpush1.bf16.msra.mxu0 0
        %1181 = vmatprep.subr.bf16.mxu0 0
        %1182 = vmatpush1.bf16.msra.mxu0 0
        %1183 = vmatprep.subr.bf16.mxu0 0
        %1184 = vmatpush1.bf16.msra.mxu0 0
        %1185 = vmatprep.subr.bf16.mxu0 0
        %1186 = vmatpush1.bf16.msra.mxu0 0
        %1187 = vmatprep.subr.bf16.mxu0 0
        %1188 = vmatpush1.bf16.msra.mxu0 0
        %1189 = vmatprep.subr.bf16.mxu0 0
        %1190 = vmatpush1.bf16.msra.mxu0 0
        %1191 = vmatprep.subr.bf16.mxu0 0
        %1192 = vmatpush1.bf16.msra.mxu0 0
        %1193 = vmatprep.subr.bf16.mxu0 0
        %1194 = vmatpush1.bf16.msra.mxu0 0
        %1195 = vmatprep.subr.bf16.mxu0 0
        %1196 = vmatpush1.bf16.msra.mxu0 0
        %1197 = vmatprep.subr.bf16.mxu0 0
        %1198 = vmatpush1.bf16.msra.mxu0 0
        %1199 = vmatprep.mubr.bf16.mxu0 0
        %1200 = vmatmul.mubr.bf16.gmra.mrb[0].mxu0 %v1165
        %v1201 = vpop.f32.mrb[0].mxu0
        %v1202 = vadd.f32 %v1150, %v1201
        %v1203 = vpop.f32.mrb[0].mxu0
        %v1204 = vpop.f32.mrb[0].mxu0
        %v1205 = vpop.f32.mrb[0].mxu0
        %1206 = vdwg.mxu0
        %v1207 = vmul.f32 %v1202, 0.35355338
        %v1208 = vpack.c.bf16 %v1207, %v1207
        %vm1209 = vcmask 257024
        %1210 = vst.msk [vmem:[#allocation4] sm:$0xf] %vm1209, %v1208
        %v1211 = vld [vmem:[#allocation25] sm:$0x1]
        %v1213 = vlaneseq
        %v1214 = vshrl.u32 %v1213, 7
        %v1215 = vsub.s32 0, %v1214
        %v1216 = vrot.slane %v1211, %v1215
        %v1218 = vadd.f32 %v1108, %v1216
        %v1219 = vld [vmem:[#allocation4] sm:$0xf]
        %v1220 = vld [vmem:[#allocation2] sm:$0xff]
        %v1221 = vld [vmem:[#allocation3] sm:$0xff]
        %vm1222 = vcmask 64512
        %v1224 = vsel %vm1222, %v1219, 0
        %v1227 = vsel %vm1222, %v1220, 0
        %1229 = vmatprep.subr.bf16.mxu0 0
        %1230 = vmatpush1.bf16.xpose.msra.mxu0 %v1227
        %1231 = vmatprep.subr.bf16.mxu0 0
        %1232 = vmatpush1.bf16.xpose.msra.mxu0 0
        %1233 = vmatprep.subr.bf16.mxu0 0
        %1234 = vmatpush1.bf16.xpose.msra.mxu0 0
        %1235 = vmatprep.subr.bf16.mxu0 0
        %1236 = vmatpush1.bf16.xpose.msra.mxu0 0
        %1237 = vmatprep.subr.bf16.mxu0 0
        %1238 = vmatpush1.bf16.xpose.msra.mxu0 0
        %1239 = vmatprep.subr.bf16.mxu0 0
        %1240 = vmatpush1.bf16.xpose.msra.mxu0 0
        %1241 = vmatprep.subr.bf16.mxu0 0
        %1242 = vmatpush1.bf16.xpose.msra.mxu0 0
        %1243 = vmatprep.subr.bf16.mxu0 0
        %1244 = vmatpush1.bf16.xpose.msra.mxu0 0
        %1245 = vmatprep.subr.bf16.mxu0 0
        %1246 = vmatpush1.bf16.xpose.msra.mxu0 0
        %1247 = vmatprep.subr.bf16.mxu0 0
        %1248 = vmatpush1.bf16.xpose.msra.mxu0 0
        %1249 = vmatprep.subr.bf16.mxu0 0
        %1250 = vmatpush1.bf16.xpose.msra.mxu0 0
        %1251 = vmatprep.subr.bf16.mxu0 0
        %1252 = vmatpush1.bf16.xpose.msra.mxu0 0
        %1253 = vmatprep.subr.bf16.mxu0 0
        %1254 = vmatpush1.bf16.xpose.msra.mxu0 0
        %1255 = vmatprep.subr.bf16.mxu0 0
        %1256 = vmatpush1.bf16.xpose.msra.mxu0 0
        %1257 = vmatprep.subr.bf16.mxu0 0
        %1258 = vmatpush1.bf16.xpose.msra.mxu0 0
        %1259 = vmatprep.subr.bf16.mxu0 0
        %1260 = vmatpush1.bf16.xpose.msra.mxu0 0
        %1261 = vmatprep.mubr.bf16.mxu0 0
        %1262 = vmatmul.mubr.bf16.gmra.mrb[0].mxu0 %v1224
        %v1263 = vpop.f32.mrb[0].mxu0
        %v1264 = vadd.f32 0.0, %v1263
        %v1265 = vpop.f32.mrb[0].mxu0
        %v1266 = vpop.f32.mrb[0].mxu0
        %v1267 = vpop.f32.mrb[0].mxu0
        %1268 = vdwg.mxu0
        %v1269 = vsel %vm1110, 1, 0
        %v1270 = vlaneseq
        %v1271 = vshrl.u32 %v1270, 7
        %v1272 = vsub.s32 0, %v1271
        %v1273 = vrot.slane %v1269, %v1272
        %vm1274 = vcmp.eq.s32.totalorder %v1273, 1
        %v1275 = vsel %vm1274, %v1264, -1e+10
        %vm1276 = vcmask 130048
        %v1277 = vsel %vm1276, %v1275, -inf
        %1278 = vmax.xlane.f32.xlu0 %v1277
        %v1279 = vpop.xlane.xlu0 %1278
        %v1280 = vsub.f32 %v1275, %v1279
        %v1281 = vmul.f32 %v1280, 1.442695
        %v1282 = vpow.pop %v1281
        %v1283 = vsel %vm1276, %v1282, 0.0
        %1284 = vadd.xlane.f32.xlu0 %v1283
        %v1285 = vpop.xlane.xlu0 %1284
        %v1286 = vrcp.pop %v1285
        %v1287 = vmul.f32 %v1282, %v1286
        %v1288 = vpack.c.bf16 %v1287, %v1287
        %v1290 = vsel %vm1276, %v1288, 0
        %1292 = vmatprep.subr.bf16.mxu0 0
        %1293 = vmatpush1.bf16.msra.mxu0 %v1221
        %1294 = vmatprep.subr.bf16.mxu0 0
        %1295 = vmatpush1.bf16.msra.mxu0 0
        %1296 = vmatprep.subr.bf16.mxu0 0
        %1297 = vmatpush1.bf16.msra.mxu0 0
        %1298 = vmatprep.subr.bf16.mxu0 0
        %1299 = vmatpush1.bf16.msra.mxu0 0
        %1300 = vmatprep.subr.bf16.mxu0 0
        %1301 = vmatpush1.bf16.msra.mxu0 0
        %1302 = vmatprep.subr.bf16.mxu0 0
        %1303 = vmatpush1.bf16.msra.mxu0 0
        %1304 = vmatprep.subr.bf16.mxu0 0
        %1305 = vmatpush1.bf16.msra.mxu0 0
        %1306 = vmatprep.subr.bf16.mxu0 0
        %1307 = vmatpush1.bf16.msra.mxu0 0
        %1308 = vmatprep.subr.bf16.mxu0 0
        %1309 = vmatpush1.bf16.msra.mxu0 0
        %1310 = vmatprep.subr.bf16.mxu0 0
        %1311 = vmatpush1.bf16.msra.mxu0 0
        %1312 = vmatprep.subr.bf16.mxu0 0
        %1313 = vmatpush1.bf16.msra.mxu0 0
        %1314 = vmatprep.subr.bf16.mxu0 0
        %1315 = vmatpush1.bf16.msra.mxu0 0
        %1316 = vmatprep.subr.bf16.mxu0 0
        %1317 = vmatpush1.bf16.msra.mxu0 0
        %1318 = vmatprep.subr.bf16.mxu0 0
        %1319 = vmatpush1.bf16.msra.mxu0 0
        %1320 = vmatprep.subr.bf16.mxu0 0
        %1321 = vmatpush1.bf16.msra.mxu0 0
        %1322 = vmatprep.subr.bf16.mxu0 0
        %1323 = vmatpush1.bf16.msra.mxu0 0
        %1324 = vmatprep.mubr.bf16.mxu0 0
        %1325 = vmatmul.mubr.bf16.gmra.mrb[0].mxu0 %v1290
        %v1326 = vpop.f32.mrb[0].mxu0
        %v1327 = vadd.f32 0.0, %v1326
        %v1328 = vpop.f32.mrb[0].mxu0
        %v1329 = vpop.f32.mrb[0].mxu0
        %v1330 = vpop.f32.mrb[0].mxu0
        %1331 = vdwg.mxu0
        %v1332 = vpack.c.bf16 %v1327, %v1327
        %v1333 = vld [vmem:[#allocation23] sm:$0xf]
        %v1335 = vsel %vm1222, %v1332, 0
        %vm1337 = vcmask 1043456
        %v1339 = vsel %vm1337, %v1333, 0
        %1341 = vmatprep.subr.bf16.mxu0 0
        %1342 = vmatpush1.bf16.msra.mxu0 %v1339
        %1343 = vmatprep.subr.bf16.mxu0 0
        %1344 = vmatpush1.bf16.msra.mxu0 0
        %1345 = vmatprep.subr.bf16.mxu0 0
        %1346 = vmatpush1.bf16.msra.mxu0 0
        %1347 = vmatprep.subr.bf16.mxu0 0
        %1348 = vmatpush1.bf16.msra.mxu0 0
        %1349 = vmatprep.subr.bf16.mxu0 0
        %1350 = vmatpush1.bf16.msra.mxu0 0
        %1351 = vmatprep.subr.bf16.mxu0 0
        %1352 = vmatpush1.bf16.msra.mxu0 0
        %1353 = vmatprep.subr.bf16.mxu0 0
        %1354 = vmatpush1.bf16.msra.mxu0 0
        %1355 = vmatprep.subr.bf16.mxu0 0
        %1356 = vmatpush1.bf16.msra.mxu0 0
        %1357 = vmatprep.subr.bf16.mxu0 0
        %1358 = vmatpush1.bf16.msra.mxu0 0
        %1359 = vmatprep.subr.bf16.mxu0 0
        %1360 = vmatpush1.bf16.msra.mxu0 0
        %1361 = vmatprep.subr.bf16.mxu0 0
        %1362 = vmatpush1.bf16.msra.mxu0 0
        %1363 = vmatprep.subr.bf16.mxu0 0
        %1364 = vmatpush1.bf16.msra.mxu0 0
        %1365 = vmatprep.subr.bf16.mxu0 0
        %1366 = vmatpush1.bf16.msra.mxu0 0
        %1367 = vmatprep.subr.bf16.mxu0 0
        %1368 = vmatpush1.bf16.msra.mxu0 0
        %1369 = vmatprep.subr.bf16.mxu0 0
        %1370 = vmatpush1.bf16.msra.mxu0 0
        %1371 = vmatprep.subr.bf16.mxu0 0
        %1372 = vmatpush1.bf16.msra.mxu0 0
        %1373 = vmatprep.mubr.bf16.mxu0 0
        %1374 = vmatmul.mubr.bf16.gmra.mrb[0].mxu0 %v1335
        %v1375 = vpop.f32.mrb[0].mxu0
        %v1376 = vadd.f32 0.0, %v1375
        %v1377 = vpop.f32.mrb[0].mxu0
        %v1378 = vpop.f32.mrb[0].mxu0
        %v1379 = vpop.f32.mrb[0].mxu0
        %1380 = vdwg.mxu0
        %v1381 = vadd.f32 %v1218, %v1376
        %v1383 = vunpack.c.l.b16 %v1219
        %v1384 = vpack.c.b16 %v1383, %v1383
        %1385 = vrot.lane.b32.xlu0 %v1384, 120
        %v1386 = vpop.permute.xlu0 %1385
        %1388 = vrot.lane.b32.xlu0 %v1220, 120
        %v1389 = vpop.permute.xlu0 %1388
        %v1391 = vsel %vm1222, %v1386, 0
        %v1394 = vsel %vm1222, %v1389, 0
        %1396 = vmatprep.subr.bf16.mxu0 0
        %1397 = vmatpush1.bf16.xpose.msra.mxu0 %v1394
        %1398 = vmatprep.subr.bf16.mxu0 0
        %1399 = vmatpush1.bf16.xpose.msra.mxu0 0
        %1400 = vmatprep.subr.bf16.mxu0 0
        %1401 = vmatpush1.bf16.xpose.msra.mxu0 0
        %1402 = vmatprep.subr.bf16.mxu0 0
        %1403 = vmatpush1.bf16.xpose.msra.mxu0 0
        %1404 = vmatprep.subr.bf16.mxu0 0
        %1405 = vmatpush1.bf16.xpose.msra.mxu0 0
        %1406 = vmatprep.subr.bf16.mxu0 0
        %1407 = vmatpush1.bf16.xpose.msra.mxu0 0
        %1408 = vmatprep.subr.bf16.mxu0 0
        %1409 = vmatpush1.bf16.xpose.msra.mxu0 0
        %1410 = vmatprep.subr.bf16.mxu0 0
        %1411 = vmatpush1.bf16.xpose.msra.mxu0 0
        %1412 = vmatprep.subr.bf16.mxu0 0
        %1413 = vmatpush1.bf16.xpose.msra.mxu0 0
        %1414 = vmatprep.subr.bf16.mxu0 0
        %1415 = vmatpush1.bf16.xpose.msra.mxu0 0
        %1416 = vmatprep.subr.bf16.mxu0 0
        %1417 = vmatpush1.bf16.xpose.msra.mxu0 0
        %1418 = vmatprep.subr.bf16.mxu0 0
        %1419 = vmatpush1.bf16.xpose.msra.mxu0 0
        %1420 = vmatprep.subr.bf16.mxu0 0
        %1421 = vmatpush1.bf16.xpose.msra.mxu0 0
        %1422 = vmatprep.subr.bf16.mxu0 0
        %1423 = vmatpush1.bf16.xpose.msra.mxu0 0
        %1424 = vmatprep.subr.bf16.mxu0 0
        %1425 = vmatpush1.bf16.xpose.msra.mxu0 0
        %1426 = vmatprep.subr.bf16.mxu0 0
        %1427 = vmatpush1.bf16.xpose.msra.mxu0 0
        %1428 = vmatprep.mubr.bf16.mxu0 0
        %1429 = vmatmul.mubr.bf16.gmra.mrb[0].mxu0 %v1391
        %v1430 = vpop.f32.mrb[0].mxu0
        %v1431 = vadd.f32 0.0, %v1430
        %v1432 = vpop.f32.mrb[0].mxu0
        %v1433 = vpop.f32.mrb[0].mxu0
        %v1434 = vpop.f32.mrb[0].mxu0
        %1435 = vdwg.mxu0
        %v1436 = vsel %vm1274, %v1431, -1e+10
        %v1437 = vsel %vm1276, %v1436, -inf
        %1438 = vmax.xlane.f32.xlu0 %v1437
        %v1439 = vpop.xlane.xlu0 %1438
        %v1440 = vsub.f32 %v1436, %v1439
        %v1441 = vmul.f32 %v1440, 1.442695
        %v1442 = vpow.pop %v1441
        %v1443 = vsel %vm1276, %v1442, 0.0
        %1444 = vadd.xlane.f32.xlu0 %v1443
        %v1445 = vpop.xlane.xlu0 %1444
        %v1446 = vrcp.pop %v1445
        %v1447 = vmul.f32 %v1442, %v1446
        %v1448 = vpack.c.bf16 %v1447, %v1447
        %1450 = vrot.lane.b32.xlu0 %v1221, 120
        %v1451 = vpop.permute.xlu0 %1450
        %v1454 = vsel %vm1276, %v1448, 0
        %1456 = vmatprep.subr.bf16.mxu0 0
        %1457 = vmatpush1.bf16.msra.mxu0 %v1451
        %1458 = vmatprep.subr.bf16.mxu0 0
        %1459 = vmatpush1.bf16.msra.mxu0 0
        %1460 = vmatprep.subr.bf16.mxu0 0
        %1461 = vmatpush1.bf16.msra.mxu0 0
        %1462 = vmatprep.subr.bf16.mxu0 0
        %1463 = vmatpush1.bf16.msra.mxu0 0
        %1464 = vmatprep.subr.bf16.mxu0 0
        %1465 = vmatpush1.bf16.msra.mxu0 0
        %1466 = vmatprep.subr.bf16.mxu0 0
        %1467 = vmatpush1.bf16.msra.mxu0 0
        %1468 = vmatprep.subr.bf16.mxu0 0
        %1469 = vmatpush1.bf16.msra.mxu0 0
        %1470 = vmatprep.subr.bf16.mxu0 0
        %1471 = vmatpush1.bf16.msra.mxu0 0
        %1472 = vmatprep.subr.bf16.mxu0 0
        %1473 = vmatpush1.bf16.msra.mxu0 0
        %1474 = vmatprep.subr.bf16.mxu0 0
        %1475 = vmatpush1.bf16.msra.mxu0 0
        %1476 = vmatprep.subr.bf16.mxu0 0
        %1477 = vmatpush1.bf16.msra.mxu0 0
        %1478 = vmatprep.subr.bf16.mxu0 0
        %1479 = vmatpush1.bf16.msra.mxu0 0
        %1480 = vmatprep.subr.bf16.mxu0 0
        %1481 = vmatpush1.bf16.msra.mxu0 0
        %1482 = vmatprep.subr.bf16.mxu0 0
        %1483 = vmatpush1.bf16.msra.mxu0 0
        %1484 = vmatprep.subr.bf16.mxu0 0
        %1485 = vmatpush1.bf16.msra.mxu0 0
        %1486 = vmatprep.subr.bf16.mxu0 0
        %1487 = vmatpush1.bf16.msra.mxu0 0
        %1488 = vmatprep.mubr.bf16.mxu0 0
        %1489 = vmatmul.mubr.bf16.gmra.mrb[0].mxu0 %v1454
        %v1490 = vpop.f32.mrb[0].mxu0
        %v1491 = vadd.f32 0.0, %v1490
        %v1492 = vpop.f32.mrb[0].mxu0
        %v1493 = vpop.f32.mrb[0].mxu0
        %v1494 = vpop.f32.mrb[0].mxu0
        %1495 = vdwg.mxu0
        %v1496 = vpack.c.bf16 %v1491, %v1491
        %v1497 = vld [vmem:[#allocation23 + $0x4] sm:$0xf]
        %v1499 = vsel %vm1222, %v1496, 0
        %v1502 = vsel %vm1337, %v1497, 0
        %1504 = vmatprep.subr.bf16.mxu0 0
        %1505 = vmatpush1.bf16.msra.mxu0 %v1502
        %1506 = vmatprep.subr.bf16.mxu0 0
        %1507 = vmatpush1.bf16.msra.mxu0 0
        %1508 = vmatprep.subr.bf16.mxu0 0
        %1509 = vmatpush1.bf16.msra.mxu0 0
        %1510 = vmatprep.subr.bf16.mxu0 0
        %1511 = vmatpush1.bf16.msra.mxu0 0
        %1512 = vmatprep.subr.bf16.mxu0 0
        %1513 = vmatpush1.bf16.msra.mxu0 0
        %1514 = vmatprep.subr.bf16.mxu0 0
        %1515 = vmatpush1.bf16.msra.mxu0 0
        %1516 = vmatprep.subr.bf16.mxu0 0
        %1517 = vmatpush1.bf16.msra.mxu0 0
        %1518 = vmatprep.subr.bf16.mxu0 0
        %1519 = vmatpush1.bf16.msra.mxu0 0
        %1520 = vmatprep.subr.bf16.mxu0 0
        %1521 = vmatpush1.bf16.msra.mxu0 0
        %1522 = vmatprep.subr.bf16.mxu0 0
        %1523 = vmatpush1.bf16.msra.mxu0 0
        %1524 = vmatprep.subr.bf16.mxu0 0
        %1525 = vmatpush1.bf16.msra.mxu0 0
        %1526 = vmatprep.subr.bf16.mxu0 0
        %1527 = vmatpush1.bf16.msra.mxu0 0
        %1528 = vmatprep.subr.bf16.mxu0 0
        %1529 = vmatpush1.bf16.msra.mxu0 0
        %1530 = vmatprep.subr.bf16.mxu0 0
        %1531 = vmatpush1.bf16.msra.mxu0 0
        %1532 = vmatprep.subr.bf16.mxu0 0
        %1533 = vmatpush1.bf16.msra.mxu0 0
        %1534 = vmatprep.subr.bf16.mxu0 0
        %1535 = vmatpush1.bf16.msra.mxu0 0
        %1536 = vmatprep.mubr.bf16.mxu0 0
        %1537 = vmatmul.mubr.bf16.gmra.mrb[0].mxu0 %v1499
        %v1538 = vpop.f32.mrb[0].mxu0
        %v1539 = vadd.f32 0.0, %v1538
        %v1540 = vpop.f32.mrb[0].mxu0
        %v1541 = vpop.f32.mrb[0].mxu0
        %v1542 = vpop.f32.mrb[0].mxu0
        %1543 = vdwg.mxu0
        %v1544 = vadd.f32 %v1381, %v1539
        %1545 = vrot.lane.b32.xlu0 %v1384, 112
        %v1546 = vpop.permute.xlu0 %1545
        %1547 = vrot.lane.b32.xlu0 %v1220, 112
        %v1548 = vpop.permute.xlu0 %1547
        %v1550 = vsel %vm1222, %v1546, 0
        %v1553 = vsel %vm1222, %v1548, 0
        %1555 = vmatprep.subr.bf16.mxu0 0
        %1556 = vmatpush1.bf16.xpose.msra.mxu0 %v1553
        %1557 = vmatprep.subr.bf16.mxu0 0
        %1558 = vmatpush1.bf16.xpose.msra.mxu0 0
        %1559 = vmatprep.subr.bf16.mxu0 0
        %1560 = vmatpush1.bf16.xpose.msra.mxu0 0
        %1561 = vmatprep.subr.bf16.mxu0 0
        %1562 = vmatpush1.bf16.xpose.msra.mxu0 0
        %1563 = vmatprep.subr.bf16.mxu0 0
        %1564 = vmatpush1.bf16.xpose.msra.mxu0 0
        %1565 = vmatprep.subr.bf16.mxu0 0
        %1566 = vmatpush1.bf16.xpose.msra.mxu0 0
        %1567 = vmatprep.subr.bf16.mxu0 0
        %1568 = vmatpush1.bf16.xpose.msra.mxu0 0
        %1569 = vmatprep.subr.bf16.mxu0 0
        %1570 = vmatpush1.bf16.xpose.msra.mxu0 0
        %1571 = vmatprep.subr.bf16.mxu0 0
        %1572 = vmatpush1.bf16.xpose.msra.mxu0 0
        %1573 = vmatprep.subr.bf16.mxu0 0
        %1574 = vmatpush1.bf16.xpose.msra.mxu0 0
        %1575 = vmatprep.subr.bf16.mxu0 0
        %1576 = vmatpush1.bf16.xpose.msra.mxu0 0
        %1577 = vmatprep.subr.bf16.mxu0 0
        %1578 = vmatpush1.bf16.xpose.msra.mxu0 0
        %1579 = vmatprep.subr.bf16.mxu0 0
        %1580 = vmatpush1.bf16.xpose.msra.mxu0 0
        %1581 = vmatprep.subr.bf16.mxu0 0
        %1582 = vmatpush1.bf16.xpose.msra.mxu0 0
        %1583 = vmatprep.subr.bf16.mxu0 0
        %1584 = vmatpush1.bf16.xpose.msra.mxu0 0
        %1585 = vmatprep.subr.bf16.mxu0 0
        %1586 = vmatpush1.bf16.xpose.msra.mxu0 0
        %1587 = vmatprep.mubr.bf16.mxu0 0
        %1588 = vmatmul.mubr.bf16.gmra.mrb[0].mxu0 %v1550
        %v1589 = vpop.f32.mrb[0].mxu0
        %v1590 = vadd.f32 0.0, %v1589
        %v1591 = vpop.f32.mrb[0].mxu0
        %v1592 = vpop.f32.mrb[0].mxu0
        %v1593 = vpop.f32.mrb[0].mxu0
        %1594 = vdwg.mxu0
        %v1595 = vsel %vm1274, %v1590, -1e+10
        %v1596 = vsel %vm1276, %v1595, -inf
        %1597 = vmax.xlane.f32.xlu0 %v1596
        %v1598 = vpop.xlane.xlu0 %1597
        %v1599 = vsub.f32 %v1595, %v1598
        %v1600 = vmul.f32 %v1599, 1.442695
        %v1601 = vpow.pop %v1600
        %v1602 = vsel %vm1276, %v1601, 0.0
        %1603 = vadd.xlane.f32.xlu0 %v1602
        %v1604 = vpop.xlane.xlu0 %1603
        %v1605 = vrcp.pop %v1604
        %v1606 = vmul.f32 %v1601, %v1605
        %v1607 = vpack.c.bf16 %v1606, %v1606
        %1608 = vrot.lane.b32.xlu0 %v1221, 112
        %v1609 = vpop.permute.xlu0 %1608
        %v1612 = vsel %vm1276, %v1607, 0
        %1614 = vmatprep.subr.bf16.mxu0 0
        %1615 = vmatpush1.bf16.msra.mxu0 %v1609
        %1616 = vmatprep.subr.bf16.mxu0 0
        %1617 = vmatpush1.bf16.msra.mxu0 0
        %1618 = vmatprep.subr.bf16.mxu0 0
        %1619 = vmatpush1.bf16.msra.mxu0 0
        %1620 = vmatprep.subr.bf16.mxu0 0
        %1621 = vmatpush1.bf16.msra.mxu0 0
        %1622 = vmatprep.subr.bf16.mxu0 0
        %1623 = vmatpush1.bf16.msra.mxu0 0
        %1624 = vmatprep.subr.bf16.mxu0 0
        %1625 = vmatpush1.bf16.msra.mxu0 0
        %1626 = vmatprep.subr.bf16.mxu0 0
        %1627 = vmatpush1.bf16.msra.mxu0 0
        %1628 = vmatprep.subr.bf16.mxu0 0
        %1629 = vmatpush1.bf16.msra.mxu0 0
        %1630 = vmatprep.subr.bf16.mxu0 0
        %1631 = vmatpush1.bf16.msra.mxu0 0
        %1632 = vmatprep.subr.bf16.mxu0 0
        %1633 = vmatpush1.bf16.msra.mxu0 0
        %1634 = vmatprep.subr.bf16.mxu0 0
        %1635 = vmatpush1.bf16.msra.mxu0 0
        %1636 = vmatprep.subr.bf16.mxu0 0
        %1637 = vmatpush1.bf16.msra.mxu0 0
        %1638 = vmatprep.subr.bf16.mxu0 0
        %1639 = vmatpush1.bf16.msra.mxu0 0
        %1640 = vmatprep.subr.bf16.mxu0 0
        %1641 = vmatpush1.bf16.msra.mxu0 0
        %1642 = vmatprep.subr.bf16.mxu0 0
        %1643 = vmatpush1.bf16.msra.mxu0 0
        %1644 = vmatprep.subr.bf16.mxu0 0
        %1645 = vmatpush1.bf16.msra.mxu0 0
        %1646 = vmatprep.mubr.bf16.mxu0 0
        %1647 = vmatmul.mubr.bf16.gmra.mrb[0].mxu0 %v1612
        %v1648 = vpop.f32.mrb[0].mxu0
        %v1649 = vadd.f32 0.0, %v1648
        %v1650 = vpop.f32.mrb[0].mxu0
        %v1651 = vpop.f32.mrb[0].mxu0
        %v1652 = vpop.f32.mrb[0].mxu0
        %1653 = vdwg.mxu0
        %v1654 = vpack.c.bf16 %v1649, %v1649
        %v1655 = vld [vmem:[#allocation23 + $0x8] sm:$0xf]
        %v1657 = vsel %vm1222, %v1654, 0
        %v1660 = vsel %vm1337, %v1655, 0
        %1662 = vmatprep.subr.bf16.mxu0 0
        %1663 = vmatpush1.bf16.msra.mxu0 %v1660
        %1664 = vmatprep.subr.bf16.mxu0 0
        %1665 = vmatpush1.bf16.msra.mxu0 0
        %1666 = vmatprep.subr.bf16.mxu0 0
        %1667 = vmatpush1.bf16.msra.mxu0 0
        %1668 = vmatprep.subr.bf16.mxu0 0
        %1669 = vmatpush1.bf16.msra.mxu0 0
        %1670 = vmatprep.subr.bf16.mxu0 0
        %1671 = vmatpush1.bf16.msra.mxu0 0
        %1672 = vmatprep.subr.bf16.mxu0 0
        %1673 = vmatpush1.bf16.msra.mxu0 0
        %1674 = vmatprep.subr.bf16.mxu0 0
        %1675 = vmatpush1.bf16.msra.mxu0 0
        %1676 = vmatprep.subr.bf16.mxu0 0
        %1677 = vmatpush1.bf16.msra.mxu0 0
        %1678 = vmatprep.subr.bf16.mxu0 0
        %1679 = vmatpush1.bf16.msra.mxu0 0
        %1680 = vmatprep.subr.bf16.mxu0 0
        %1681 = vmatpush1.bf16.msra.mxu0 0
        %1682 = vmatprep.subr.bf16.mxu0 0
        %1683 = vmatpush1.bf16.msra.mxu0 0
        %1684 = vmatprep.subr.bf16.mxu0 0
        %1685 = vmatpush1.bf16.msra.mxu0 0
        %1686 = vmatprep.subr.bf16.mxu0 0
        %1687 = vmatpush1.bf16.msra.mxu0 0
        %1688 = vmatprep.subr.bf16.mxu0 0
        %1689 = vmatpush1.bf16.msra.mxu0 0
        %1690 = vmatprep.subr.bf16.mxu0 0
        %1691 = vmatpush1.bf16.msra.mxu0 0
        %1692 = vmatprep.subr.bf16.mxu0 0
        %1693 = vmatpush1.bf16.msra.mxu0 0
        %1694 = vmatprep.mubr.bf16.mxu0 0
        %1695 = vmatmul.mubr.bf16.gmra.mrb[0].mxu0 %v1657
        %v1696 = vpop.f32.mrb[0].mxu0
        %v1697 = vadd.f32 0.0, %v1696
        %v1698 = vpop.f32.mrb[0].mxu0
        %v1699 = vpop.f32.mrb[0].mxu0
        %v1700 = vpop.f32.mrb[0].mxu0
        %1701 = vdwg.mxu0
        %v1702 = vadd.f32 %v1544, %v1697
        %1703 = vrot.lane.b32.xlu0 %v1384, 104
        %v1704 = vpop.permute.xlu0 %1703
        %1705 = vrot.lane.b32.xlu0 %v1220, 104
        %v1706 = vpop.permute.xlu0 %1705
        %v1708 = vsel %vm1222, %v1704, 0
        %v1711 = vsel %vm1222, %v1706, 0
        %1713 = vmatprep.subr.bf16.mxu0 0
        %1714 = vmatpush1.bf16.xpose.msra.mxu0 %v1711
        %1715 = vmatprep.subr.bf16.mxu0 0
        %1716 = vmatpush1.bf16.xpose.msra.mxu0 0
        %1717 = vmatprep.subr.bf16.mxu0 0
        %1718 = vmatpush1.bf16.xpose.msra.mxu0 0
        %1719 = vmatprep.subr.bf16.mxu0 0
        %1720 = vmatpush1.bf16.xpose.msra.mxu0 0
        %1721 = vmatprep.subr.bf16.mxu0 0
        %1722 = vmatpush1.bf16.xpose.msra.mxu0 0
        %1723 = vmatprep.subr.bf16.mxu0 0
        %1724 = vmatpush1.bf16.xpose.msra.mxu0 0
        %1725 = vmatprep.subr.bf16.mxu0 0
        %1726 = vmatpush1.bf16.xpose.msra.mxu0 0
        %1727 = vmatprep.subr.bf16.mxu0 0
        %1728 = vmatpush1.bf16.xpose.msra.mxu0 0
        %1729 = vmatprep.subr.bf16.mxu0 0
        %1730 = vmatpush1.bf16.xpose.msra.mxu0 0
        %1731 = vmatprep.subr.bf16.mxu0 0
        %1732 = vmatpush1.bf16.xpose.msra.mxu0 0
        %1733 = vmatprep.subr.bf16.mxu0 0
        %1734 = vmatpush1.bf16.xpose.msra.mxu0 0
        %1735 = vmatprep.subr.bf16.mxu0 0
        %1736 = vmatpush1.bf16.xpose.msra.mxu0 0
        %1737 = vmatprep.subr.bf16.mxu0 0
        %1738 = vmatpush1.bf16.xpose.msra.mxu0 0
        %1739 = vmatprep.subr.bf16.mxu0 0
        %1740 = vmatpush1.bf16.xpose.msra.mxu0 0
        %1741 = vmatprep.subr.bf16.mxu0 0
        %1742 = vmatpush1.bf16.xpose.msra.mxu0 0
        %1743 = vmatprep.subr.bf16.mxu0 0
        %1744 = vmatpush1.bf16.xpose.msra.mxu0 0
        %1745 = vmatprep.mubr.bf16.mxu0 0
        %1746 = vmatmul.mubr.bf16.gmra.mrb[0].mxu0 %v1708
        %v1747 = vpop.f32.mrb[0].mxu0
        %v1748 = vadd.f32 0.0, %v1747
        %v1749 = vpop.f32.mrb[0].mxu0
        %v1750 = vpop.f32.mrb[0].mxu0
        %v1751 = vpop.f32.mrb[0].mxu0
        %1752 = vdwg.mxu0
        %v1753 = vsel %vm1274, %v1748, -1e+10
        %v1754 = vsel %vm1276, %v1753, -inf
        %1755 = vmax.xlane.f32.xlu0 %v1754
        %v1756 = vpop.xlane.xlu0 %1755
        %v1757 = vsub.f32 %v1753, %v1756
        %v1758 = vmul.f32 %v1757, 1.442695
        %v1759 = vpow.pop %v1758
        %v1760 = vsel %vm1276, %v1759, 0.0
        %1761 = vadd.xlane.f32.xlu0 %v1760
        %v1762 = vpop.xlane.xlu0 %1761
        %v1763 = vrcp.pop %v1762
        %v1764 = vmul.f32 %v1759, %v1763
        %v1765 = vpack.c.bf16 %v1764, %v1764
        %1766 = vrot.lane.b32.xlu0 %v1221, 104
        %v1767 = vpop.permute.xlu0 %1766
        %v1770 = vsel %vm1276, %v1765, 0
        %1772 = vmatprep.subr.bf16.mxu0 0
        %1773 = vmatpush1.bf16.msra.mxu0 %v1767
        %1774 = vmatprep.subr.bf16.mxu0 0
        %1775 = vmatpush1.bf16.msra.mxu0 0
        %1776 = vmatprep.subr.bf16.mxu0 0
        %1777 = vmatpush1.bf16.msra.mxu0 0
        %1778 = vmatprep.subr.bf16.mxu0 0
        %1779 = vmatpush1.bf16.msra.mxu0 0
        %1780 = vmatprep.subr.bf16.mxu0 0
        %1781 = vmatpush1.bf16.msra.mxu0 0
        %1782 = vmatprep.subr.bf16.mxu0 0
        %1783 = vmatpush1.bf16.msra.mxu0 0
        %1784 = vmatprep.subr.bf16.mxu0 0
        %1785 = vmatpush1.bf16.msra.mxu0 0
        %1786 = vmatprep.subr.bf16.mxu0 0
        %1787 = vmatpush1.bf16.msra.mxu0 0
        %1788 = vmatprep.subr.bf16.mxu0 0
        %1789 = vmatpush1.bf16.msra.mxu0 0
        %1790 = vmatprep.subr.bf16.mxu0 0
        %1791 = vmatpush1.bf16.msra.mxu0 0
        %1792 = vmatprep.subr.bf16.mxu0 0
        %1793 = vmatpush1.bf16.msra.mxu0 0
        %1794 = vmatprep.subr.bf16.mxu0 0
        %1795 = vmatpush1.bf16.msra.mxu0 0
        %1796 = vmatprep.subr.bf16.mxu0 0
        %1797 = vmatpush1.bf16.msra.mxu0 0
        %1798 = vmatprep.subr.bf16.mxu0 0
        %1799 = vmatpush1.bf16.msra.mxu0 0
        %1800 = vmatprep.subr.bf16.mxu0 0
        %1801 = vmatpush1.bf16.msra.mxu0 0
        %1802 = vmatprep.subr.bf16.mxu0 0
        %1803 = vmatpush1.bf16.msra.mxu0 0
        %1804 = vmatprep.mubr.bf16.mxu0 0
        %1805 = vmatmul.mubr.bf16.gmra.mrb[0].mxu0 %v1770
        %v1806 = vpop.f32.mrb[0].mxu0
        %v1807 = vadd.f32 0.0, %v1806
        %v1808 = vpop.f32.mrb[0].mxu0
        %v1809 = vpop.f32.mrb[0].mxu0
        %v1810 = vpop.f32.mrb[0].mxu0
        %1811 = vdwg.mxu0
        %v1812 = vpack.c.bf16 %v1807, %v1807
        %v1813 = vld [vmem:[#allocation23 + $0xc] sm:$0xf]
        %v1815 = vsel %vm1222, %v1812, 0
        %v1818 = vsel %vm1337, %v1813, 0
        %1820 = vmatprep.subr.bf16.mxu0 0
        %1821 = vmatpush1.bf16.msra.mxu0 %v1818
        %1822 = vmatprep.subr.bf16.mxu0 0
        %1823 = vmatpush1.bf16.msra.mxu0 0
        %1824 = vmatprep.subr.bf16.mxu0 0
        %1825 = vmatpush1.bf16.msra.mxu0 0
        %1826 = vmatprep.subr.bf16.mxu0 0
        %1827 = vmatpush1.bf16.msra.mxu0 0
        %1828 = vmatprep.subr.bf16.mxu0 0
        %1829 = vmatpush1.bf16.msra.mxu0 0
        %1830 = vmatprep.subr.bf16.mxu0 0
        %1831 = vmatpush1.bf16.msra.mxu0 0
        %1832 = vmatprep.subr.bf16.mxu0 0
        %1833 = vmatpush1.bf16.msra.mxu0 0
        %1834 = vmatprep.subr.bf16.mxu0 0
        %1835 = vmatpush1.bf16.msra.mxu0 0
        %1836 = vmatprep.subr.bf16.mxu0 0
        %1837 = vmatpush1.bf16.msra.mxu0 0
        %1838 = vmatprep.subr.bf16.mxu0 0
        %1839 = vmatpush1.bf16.msra.mxu0 0
        %1840 = vmatprep.subr.bf16.mxu0 0
        %1841 = vmatpush1.bf16.msra.mxu0 0
        %1842 = vmatprep.subr.bf16.mxu0 0
        %1843 = vmatpush1.bf16.msra.mxu0 0
        %1844 = vmatprep.subr.bf16.mxu0 0
        %1845 = vmatpush1.bf16.msra.mxu0 0
        %1846 = vmatprep.subr.bf16.mxu0 0
        %1847 = vmatpush1.bf16.msra.mxu0 0
        %1848 = vmatprep.subr.bf16.mxu0 0
        %1849 = vmatpush1.bf16.msra.mxu0 0
        %1850 = vmatprep.subr.bf16.mxu0 0
        %1851 = vmatpush1.bf16.msra.mxu0 0
        %1852 = vmatprep.mubr.bf16.mxu0 0
        %1853 = vmatmul.mubr.bf16.gmra.mrb[0].mxu0 %v1815
        %v1854 = vpop.f32.mrb[0].mxu0
        %v1855 = vadd.f32 0.0, %v1854
        %v1856 = vpop.f32.mrb[0].mxu0
        %v1857 = vpop.f32.mrb[0].mxu0
        %v1858 = vpop.f32.mrb[0].mxu0
        %1859 = vdwg.mxu0
        %v1860 = vadd.f32 %v1702, %v1855
        %v1861 = vld [vmem:[#allocation26] sm:$0x1]
        %v1862 = vld [vmem:[#allocation28] sm:$0x1]
        %v1863 = vsel %vm1111, %v1860, 0.0
        %1864 = vadd.xlane.f32.xlu0 %v1863
        %v1865 = vpop.xlane.xlu0 %1864
        %v1866 = vmul.f32 %v1865, %v1115
        %v1867 = vsub.f32 %v1860, %v1866
        %v1868 = vmul.f32 %v1867, %v1867
        %v1869 = vsel %vm1111, %v1868, 0.0
        %1870 = vadd.xlane.f32.xlu0 %v1869
        %v1871 = vpop.xlane.xlu0 %1870
        %v1872 = vmul.f32 %v1871, %v1115
        %v1873 = vadd.f32 %v1872, 1e-05
        %v1874 = vrsqrt.pop %v1873
        %v1875 = vmul.f32 %v1867, %v1874
        %v1877 = vlaneseq
        %v1878 = vshrl.u32 %v1877, 7
        %v1879 = vsub.s32 0, %v1878
        %v1880 = vrot.slane %v1861, %v1879
        %v1882 = vmul.f32 %v1875, %v1880
        %v1884 = vlaneseq
        %v1885 = vshrl.u32 %v1884, 7
        %v1886 = vsub.s32 0, %v1885
        %v1887 = vrot.slane %v1862, %v1886
        %v1889 = vadd.f32 %v1882, %v1887
        %v1890 = vpack.c.bf16 %v1889, %v1889
        %v1891 = vld [vmem:[#allocation34] sm:$0x1]
        %v1893 = vlaneseq
        %v1894 = vshrl.u32 %v1893, 7
        %v1895 = vsub.s32 0, %v1894
        %v1896 = vrot.slane %v1891, %v1895
        %v1898 = vadd.f32 %v1896, 0.0
        %v1899 = vld [vmem:[#allocation29] sm:$0xf]
        %v1900 = vld [vmem:[#allocation29 + $0x4] sm:$0xf]
        %v1901 = vld [vmem:[#allocation29 + $0x8] sm:$0xf]
        %v1902 = vld [vmem:[#allocation29 + $0xc] sm:$0xf]
        %v1903 = vld [vmem:[#allocation31] sm:$0x1]
        %v1905 = vlaneseq
        %v1906 = vshrl.u32 %v1905, 7
        %v1907 = vsub.s32 0, %v1906
        %v1908 = vrot.slane %v1903, %v1907
        %v1914 = vunpack.c.l.b16 %v1899
        %v1915 = vunpack.c.l.b16 %v1900
        %v1916 = vunpack.c.l.b16 %v1901
        %v1917 = vunpack.c.l.b16 %v1902
        %v1918 = vpack.c.b16 %v1915, %v1914
        %v1919 = vpack.c.b16 %v1917, %v1916
        %v1923 = vsel %vm1111, %v1890, 0
        %1925 = vmatprep.subr.bf16.mxu0 0
        %1926 = vmatpush1.bf16.msra.mxu0 %v1918
        %1927 = vmatprep.subr.bf16.mxu0 0
        %1928 = vmatpush1.bf16.msra.mxu0 %v1919
        %1929 = vmatprep.subr.bf16.mxu0 0
        %1930 = vmatpush1.bf16.msra.mxu0 0
        %1931 = vmatprep.subr.bf16.mxu0 0
        %1932 = vmatpush1.bf16.msra.mxu0 0
        %1933 = vmatprep.subr.bf16.mxu0 0
        %1934 = vmatpush1.bf16.msra.mxu0 0
        %1935 = vmatprep.subr.bf16.mxu0 0
        %1936 = vmatpush1.bf16.msra.mxu0 0
        %1937 = vmatprep.subr.bf16.mxu0 0
        %1938 = vmatpush1.bf16.msra.mxu0 0
        %1939 = vmatprep.subr.bf16.mxu0 0
        %1940 = vmatpush1.bf16.msra.mxu0 0
        %1941 = vmatprep.subr.bf16.mxu0 0
        %1942 = vmatpush1.bf16.msra.mxu0 0
        %1943 = vmatprep.subr.bf16.mxu0 0
        %1944 = vmatpush1.bf16.msra.mxu0 0
        %1945 = vmatprep.subr.bf16.mxu0 0
        %1946 = vmatpush1.bf16.msra.mxu0 0
        %1947 = vmatprep.subr.bf16.mxu0 0
        %1948 = vmatpush1.bf16.msra.mxu0 0
        %1949 = vmatprep.subr.bf16.mxu0 0
        %1950 = vmatpush1.bf16.msra.mxu0 0
        %1951 = vmatprep.subr.bf16.mxu0 0
        %1952 = vmatpush1.bf16.msra.mxu0 0
        %1953 = vmatprep.subr.bf16.mxu0 0
        %1954 = vmatpush1.bf16.msra.mxu0 0
        %1955 = vmatprep.subr.bf16.mxu0 0
        %1956 = vmatpush1.bf16.msra.mxu0 0
        %1957 = vmatprep.mubr.bf16.mxu0 0
        %1958 = vmatmul.mubr.bf16.gmra.mrb[0].mxu0 %v1923
        %v1959 = vpop.f32.mrb[0].mxu0
        %v1960 = vadd.f32 %v1908, %v1959
        %v1961 = vpop.f32.mrb[0].mxu0
        %v1962 = vpop.f32.mrb[0].mxu0
        %v1963 = vpop.f32.mrb[0].mxu0
        %1964 = vdwg.mxu0
        %v1965 = vmax.f32 %v1960, 0.0
        %v1966 = vpack.c.bf16 %v1965, %v1965
        %v1967 = vld [vmem:[#allocation32] sm:$0xf]
        %v1968 = vld [vmem:[#allocation32 + $0x4] sm:$0xf]
        %v1969 = vld [vmem:[#allocation32 + $0x8] sm:$0xf]
        %v1970 = vld [vmem:[#allocation32 + $0xc] sm:$0xf]
        %v1971 = vld [vmem:[#allocation32 + $0x10] sm:$0xf]
        %v1972 = vld [vmem:[#allocation32 + $0x14] sm:$0xf]
        %v1973 = vld [vmem:[#allocation32 + $0x18] sm:$0xf]
        %v1974 = vld [vmem:[#allocation32 + $0x1c] sm:$0xf]
        %v1983 = vunpack.c.l.b16 %v1967
        %v1984 = vunpack.c.l.b16 %v1968
        %v1985 = vunpack.c.l.b16 %v1969
        %v1986 = vunpack.c.l.b16 %v1970
        %v1987 = vunpack.c.l.b16 %v1971
        %v1988 = vunpack.c.l.b16 %v1972
        %v1989 = vunpack.c.l.b16 %v1973
        %v1990 = vunpack.c.l.b16 %v1974
        %v1991 = vpack.c.b16 %v1984, %v1983
        %v1992 = vpack.c.b16 %v1986, %v1985
        %v1993 = vpack.c.b16 %v1988, %v1987
        %v1994 = vpack.c.b16 %v1990, %v1989
        %vm1999 = vcmask 523264
        %v2001 = vsel %vm1999, %v1966, 0
        %2003 = vmatprep.subr.bf16.mxu0 0
        %2004 = vmatpush1.bf16.msra.mxu0 %v1991
        %2005 = vmatprep.subr.bf16.mxu0 0
        %2006 = vmatpush1.bf16.msra.mxu0 %v1992
        %2007 = vmatprep.subr.bf16.mxu0 0
        %2008 = vmatpush1.bf16.msra.mxu0 %v1993
        %2009 = vmatprep.subr.bf16.mxu0 0
        %2010 = vmatpush1.bf16.msra.mxu0 %v1994
        %2011 = vmatprep.subr.bf16.mxu0 0
        %2012 = vmatpush1.bf16.msra.mxu0 0
        %2013 = vmatprep.subr.bf16.mxu0 0
        %2014 = vmatpush1.bf16.msra.mxu0 0
        %2015 = vmatprep.subr.bf16.mxu0 0
        %2016 = vmatpush1.bf16.msra.mxu0 0
        %2017 = vmatprep.subr.bf16.mxu0 0
        %2018 = vmatpush1.bf16.msra.mxu0 0
        %2019 = vmatprep.subr.bf16.mxu0 0
        %2020 = vmatpush1.bf16.msra.mxu0 0
        %2021 = vmatprep.subr.bf16.mxu0 0
        %2022 = vmatpush1.bf16.msra.mxu0 0
        %2023 = vmatprep.subr.bf16.mxu0 0
        %2024 = vmatpush1.bf16.msra.mxu0 0
        %2025 = vmatprep.subr.bf16.mxu0 0
        %2026 = vmatpush1.bf16.msra.mxu0 0
        %2027 = vmatprep.subr.bf16.mxu0 0
        %2028 = vmatpush1.bf16.msra.mxu0 0
        %2029 = vmatprep.subr.bf16.mxu0 0
        %2030 = vmatpush1.bf16.msra.mxu0 0
        %2031 = vmatprep.subr.bf16.mxu0 0
        %2032 = vmatpush1.bf16.msra.mxu0 0
        %2033 = vmatprep.subr.bf16.mxu0 0
        %2034 = vmatpush1.bf16.msra.mxu0 0
        %2035 = vmatprep.mubr.bf16.mxu0 0
        %2036 = vmatmul.mubr.bf16.gmra.mrb[0].mxu0 %v2001
        %v2037 = vpop.f32.mrb[0].mxu0
        %v2038 = vadd.f32 0.0, %v2037
        %v2039 = vpop.f32.mrb[0].mxu0
        %v2040 = vpop.f32.mrb[0].mxu0
        %v2041 = vpop.f32.mrb[0].mxu0
        %2042 = vdwg.mxu0
        %v2043 = vadd.f32 %v1898, %v2038
        %v2044 = vadd.f32 %v1860, %v2043
        %2045 = vst.msk [vmem:[%s918] sm:$0xff] %vm1111, %v2044
        %s2046 = sand.u32 %s485, 1
        %s2047 = scalar_lea.sflag [#allocation7], %s2046
        %s2048 = sand.u32 %s485, 1
        %s2049 = smul.addr %s2048, 8
        %s2050 = scalar_lea.vmem [#allocation35], %s2049
        // Predicated region
        $region177: #{tpu_custom_call.1} parent=95 // pred_check
          %p2051 = pneg %p495
        $region178: #{tpu_custom_call.1} parent=95 // pred_check_branch
          %2053 = sbr.rel (%p2051) target = $region180
        $region179: #{tpu_custom_call.1} parent=95 // pred_region
          %s2055 = ssub.s32 128, 128
          %2056 = vsyncadd %s2047, %s2055
          %s2057 = smul.addr %s51, 2
          %s2058 = sadd.s32 %s52, %s2057
          %s2059 = smul.addr %s2058, 128
          %s2060 = scalar_lea.hbm %s19, %s2059
          %s2062 = sshll.u32 %s2050, 4
          %s2063 = int_to_ptr.vmem [resolvable:$true] %s2062
          %2065 = dma.vmem_to_hbm [thread:$0]  %s2063, 128, %s2060, %s2047
        $region180: #{tpu_custom_call.1} parent=95 // pred_fallthru
          _
      $region96: #{tpu_custom_call.1} parent=5 // pred_fallthru
        _
      %p2066 = scmp.le.s32.totalorder 2, %s42
      // Predicated region
      $region181: #{tpu_custom_call.1} parent=5 // pred_check
        %p2067 = pneg %p2066
      $region182: #{tpu_custom_call.1} parent=5 // pred_check_branch
        %2069 = sbr.rel (%p2067) target = $region184
      $region183: #{tpu_custom_call.1} parent=5 // pred_region
        %s2070 = ssub.s32 %s42, 2
        // Predicated region
        $region185: #{tpu_custom_call.1} parent=183 // pred_check
          %p2071 = pneg %p501
        $region186: #{tpu_custom_call.1} parent=183 // pred_check_branch
          %2073 = sbr.rel (%p2071) target = $region188
        $region187: #{tpu_custom_call.1} parent=183 // pred_region
          %s2074 = sand.u32 %s486, 1
          %s2075 = scalar_lea.sflag [#allocation7], %s2074
          %s2076 = sand.u32 %s486, 1
          %s2077 = smul.addr %s2076, 8
          %s2078 = scalar_lea.vmem [#allocation35], %s2077
          %2079 = dma.done %s2075, 128
        $region188: #{tpu_custom_call.1} parent=183 // pred_fallthru
          _
      $region184: #{tpu_custom_call.1} parent=5 // pred_fallthru
        _
    $region6: #{tpu_custom_call.1} parent=1 // loop_footer
      %s46 = sadd.s32 1, %s42
    $region7: #{tpu_custom_call.1} parent=1 // loop_footer_branch
      %41 = sbr.rel target = $region3
    $region8: #{tpu_custom_call.1} parent=1 // loop_exit
      _
    %2080 = vsyncpa [#allocation6], 1
    %s2081 = scalar_lea.sflag [#allocation6], 1
    %2082 = vsyncpa %s2081, 1
    %2083 = vsyncpa [#allocation9], 1
    %s2084 = scalar_lea.sflag [#allocation9], 1
    %2085 = vsyncpa %s2084, 1
    %2086 = vsyncpa [#allocation12], 1
    %2087 = vsyncpa [#allocation15], 1
    %2088 = vsyncpa [#allocation18], 1
    %2089 = vsyncpa [#allocation21], 1
    %2090 = vsyncpa [#allocation24], 1
    %2091 = vsyncpa [#allocation27], 1
    %2092 = vsyncpa [#allocation30], 1
    %2093 = vsyncpa [#allocation33], 1
    %2094 = vsyncpa [#allocation7], 1
    %s2095 = scalar_lea.sflag [#allocation7], 1
    %2096 = vsyncpa %s2095, 1

</llo_original>
